<compile_context>
chip_gen: v7x
topology: tpu7x:2x2x1
jax: 0.10.0
libtpu: 0.0.40
codegen_flags: <defaults>
</compile_context>

<pallas_src>
import functools

import jax
import jax.numpy as jnp
from jax import lax
from jax.experimental import pallas as pl
from jax.experimental.pallas import tpu as pltpu  # noqa: F401  (TPU backend module)


def _round_up(v, m=128):
    return ((v + m - 1) // m) * m


# ----------------------------- Pallas kernels ------------------------------ #

def _conv_pool_relu_kernel(lpad, p_ref, w_ref, b_ref, o_ref):
    # p_ref: (K, 4*lpad) im2col patches; the 4 pool-offset slabs are concatenated
    #        along the lane axis, each slab zero-padded to `lpad` (multiple of 128).
    # w_ref: (Cout, K), b_ref: (Cout, 1), o_ref: (Cout, lpad)
    # One long MXU push over batch+offsets instead of 4 tiny matmuls.
    y = jnp.dot(w_ref[...], p_ref[...], preferred_element_type=jnp.float32)
    # 4-way max over the (128-aligned) pool-offset chunks == 2x2 max-pool.
    m = jnp.maximum(jnp.maximum(y[:, 0 * lpad:1 * lpad], y[:, 1 * lpad:2 * lpad]),
                    jnp.maximum(y[:, 2 * lpad:3 * lpad], y[:, 3 * lpad:4 * lpad]))
    # Bias is constant across pool offsets -> add once, after the max.
    o_ref[...] = jnp.maximum(m + b_ref[...], 0.0)   # relu(max_pool2d(conv(x), 2))


def conv_pool_relu(patches, w2d, b2d, lpad):
    cout = w2d.shape[0]
    return pl.pallas_call(
        functools.partial(_conv_pool_relu_kernel, lpad),
        out_shape=jax.ShapeDtypeStruct((cout, lpad), jnp.float32),
    )(patches, w2d, b2d)


def _head_kernel(x_ref, w1_ref, b1_ref, w2_ref, b2_ref, o_ref):
    # x: (N, 320); w1: (320, 50); b1: (1, 50); w2: (50, 128 padded); b2: (1, 128)
    h = jnp.dot(x_ref[...], w1_ref[...],
                preferred_element_type=jnp.float32) + b1_ref[...]
    h = jnp.maximum(h, 0.0)
    # F.dropout(x, training=self.training) is identity in eval mode.
    logits = jnp.dot(h, w2_ref[...],
                     preferred_element_type=jnp.float32) + b2_ref[...]
    # log_softmax over dim=0 (the batch axis), exactly as in the PyTorch module;
    # whole batch is resident so the cross-sublane reductions are done once here.
    m = jnp.max(logits, axis=0, keepdims=True)
    z = logits - m
    lse = jnp.log(jnp.sum(jnp.exp(z), axis=0, keepdims=True))
    o_ref[...] = z - lse


def head(x, w1t, b1, w2t_pad, b2_pad):
    n = x.shape[0]
    return pl.pallas_call(
        _head_kernel,
        out_shape=jax.ShapeDtypeStruct((n, w2t_pad.shape[1]), jnp.float32),
    )(x, w1t, b1, w2t_pad, b2_pad)


# ------------------------------- JAX glue ---------------------------------- #

def build_packed_patches(x, ksize, pool, out_hw, lpad):
    """im2col at pooled resolution, packed for a single MXU matmul.

    x: (N, C, H, W) -> (C*k*k, 4*lpad).  The lane axis holds the 4 pool-offset
    slabs back-to-back; within a slab the lane order is (n, out_row, out_col),
    zero-padded from N*out_hw^2 up to lpad (multiple of 128).
    """
    n, c, _, _ = x.shape
    p = out_hw * out_hw
    k = c * ksize * ksize
    chunks = []
    for di in range(pool):
        for dj in range(pool):
            taps = []
            for i in range(ksize):
                for j in range(ksize):
                    s = x[:, :, di + i::pool, dj + j::pool][:, :, :out_hw, :out_hw]
                    taps.append(s.reshape(n, c, p))
            slab = jnp.stack(taps, axis=2).reshape(n, k, p)      # (N, K, P)
            slab = slab.transpose(1, 0, 2).reshape(k, n * p)     # (K, N*P)
            chunks.append(jnp.pad(slab, ((0, 0), (0, lpad - n * p))))
    return jnp.concatenate(chunks, axis=1)                       # (K, 4*lpad)


@jax.jit
def net_forward(x, params):
    w1, b1, w2, b2, fw1, fb1, fw2, fb2 = params
    n = x.shape[0]

    # conv1 (1->10, k=5) -> maxpool2 -> relu   (one fused lane-packed matmul)
    l1 = n * 144
    l1p = _round_up(l1)                                          # 384 at N=2
    p1 = build_packed_patches(x, 5, 2, 12, l1p)                  # (25, 4*l1p)
    a1 = conv_pool_relu(p1, w1.reshape(10, 25), b1.reshape(10, 1), l1p)  # (10, l1p)
    a1 = a1[:, :l1].reshape(10, n, 12, 12).transpose(1, 0, 2, 3)  # (N,10,12,12)

    # conv2 (10->20, k=5) -> Dropout2d (eval: identity) -> maxpool2 -> relu
    l2 = n * 16
    l2p = _round_up(l2)                                          # 128 at N=2
    p2 = build_packed_patches(a1, 5, 2, 4, l2p)                  # (250, 4*l2p)
    a2 = conv_pool_relu(p2, w2.reshape(20, 250), b2.reshape(20, 1), l2p)  # (20, l2p)
    # channel-major flatten, matches torch .view(-1, 320)
    flat = a2[:, :l2].reshape(20, n, 16).transpose(1, 0, 2).reshape(n, 320)

    # fc1 -> relu -> dropout (eval: identity) -> fc2 -> log_softmax(dim=0)
    # fc2 weights/bias padded to 128 output lanes for a lane-dense store;
    # padded columns are independent under dim=0 log_softmax and sliced off.
    fw2p = jnp.zeros((50, 128), jnp.float32).at[:, :10].set(fw2.T)
    fb2p = jnp.zeros((1, 128), jnp.float32).at[:, :10].set(fb2)
    out = head(flat, fw1.T, fb1.reshape(1, 50), fw2p, fb2p)      # (N, 128)
    return out[:, :10]


# --------------------------- pure-JAX reference ----------------------------- #

def _maxpool2(x):
    n, c, h, w = x.shape
    return x.reshape(n, c, h // 2, 2, w // 2, 2).max(axis=(3, 5))


def reference_forward(x, params):
    w1, b1, w2, b2, fw1, fb1, fw2, fb2 = params
    dn = ("NCHW", "OIHW", "NCHW")
    c1 = lax.conv_general_dilated(x, w1, (1, 1), "VALID", dimension_numbers=dn)
    a1 = jnp.maximum(_maxpool2(c1 + b1[None, :, None, None]), 0.0)
    c2 = lax.conv_general_dilated(a1, w2, (1, 1), "VALID", dimension_numbers=dn)
    a2 = jnp.maximum(_maxpool2(c2 + b2[None, :, None, None]), 0.0)
    flat = a2.reshape(x.shape[0], -1)
    h = jnp.maximum(flat @ fw1.T + fb1, 0.0)
    logits = h @ fw2.T + fb2
    return jax.nn.log_softmax(logits, axis=0)


# ----------------------------------- main ----------------------------------- #

if __name__ == "__main__":
    key = jax.random.PRNGKey(0)
    ks = jax.random.split(key, 9)

    def init(k, shape, fan_in):
        return jax.random.normal(k, shape, jnp.float32) / jnp.sqrt(jnp.float32(fan_in))

    params = (
        init(ks[0], (10, 1, 5, 5), 25),   init(ks[1], (10,), 25),
        init(ks[2], (20, 10, 5, 5), 250), init(ks[3], (20,), 250),
        init(ks[4], (50, 320), 320),      init(ks[5], (50,), 320),
        init(ks[6], (10, 50), 50),        init(ks[7], (10,), 50),
    )
    # 28x28 input is forced by fc1 (320 = 20 * 4 * 4); small batch of 2.
    x = jax.random.normal(ks[8], (2, 1, 28, 28), jnp.float32)

    out = jax.block_until_ready(net_forward(x, params))
    ref = jax.block_until_ready(reference_forward(x, params))

    assert out.shape == (2, 10), out.shape
    assert bool(jnp.allclose(out, ref, atol=2e-3, rtol=2e-3)), (out, ref)
    print("KERNEL_OK")
</pallas_src>

<mosaic_0001>
module attributes {stable_mosaic.version = 11 : i64} {
  func.func @_conv_pool_relu_kernel(%arg0: memref<25x1536xf32, #tpu.memory_space<vmem>>, %arg1: memref<10x25xf32, #tpu.memory_space<vmem>>, %arg2: memref<10x1xf32, #tpu.memory_space<vmem>>, %arg3: memref<10x384xf32, #tpu.memory_space<vmem>>) attributes {dimension_semantics = [], scalar_prefetch = 0 : i64, scratch_operands = 0 : i64, tpu.core_type = #tpu.core_type<tc>} {
    %c0 = arith.constant 0 : index
    %c0_0 = arith.constant 0 : index
    %0 = vector.load %arg1[%c0, %c0_0] : memref<10x25xf32, #tpu.memory_space<vmem>>, vector<10x25xf32>
    %c0_1 = arith.constant 0 : index
    %c0_2 = arith.constant 0 : index
    %1 = vector.load %arg0[%c0_1, %c0_2] : memref<25x1536xf32, #tpu.memory_space<vmem>>, vector<25x1536xf32>
    %cst = arith.constant dense<0.000000e+00> : vector<10x1536xf32>
    %2 = tpu.matmul %0, %1, %cst {dimension_numbers = #tpu.dot_dimension_numbers<[1], [0], [0], [1], [0, 0, 1, 1], [], []>} : vector<10x25xf32>, vector<25x1536xf32>, vector<10x1536xf32> -> vector<10x1536xf32>
    %3 = vector.extract_strided_slice %2 {offsets = [0, 0], sizes = [10, 384], strides = [1, 1]} : vector<10x1536xf32> to vector<10x384xf32>
    %4 = vector.extract_strided_slice %2 {offsets = [0, 384], sizes = [10, 384], strides = [1, 1]} : vector<10x1536xf32> to vector<10x384xf32>
    %5 = arith.maximumf %3, %4 : vector<10x384xf32>
    %6 = vector.extract_strided_slice %2 {offsets = [0, 768], sizes = [10, 384], strides = [1, 1]} : vector<10x1536xf32> to vector<10x384xf32>
    %7 = vector.extract_strided_slice %2 {offsets = [0, 1152], sizes = [10, 384], strides = [1, 1]} : vector<10x1536xf32> to vector<10x384xf32>
    %8 = arith.maximumf %6, %7 : vector<10x384xf32>
    %9 = arith.maximumf %5, %8 : vector<10x384xf32>
    %c0_3 = arith.constant 0 : index
    %c0_4 = arith.constant 0 : index
    %10 = vector.load %arg2[%c0_3, %c0_4] : memref<10x1xf32, #tpu.memory_space<vmem>>, vector<10x1xf32>
    %11 = vector.broadcast %10 : vector<10x1xf32> to vector<10x384xf32>
    %12 = arith.addf %9, %11 : vector<10x384xf32>
    %cst_5 = arith.constant 0.000000e+00 : f32
    %13 = vector.broadcast %cst_5 : f32 to vector<10x384xf32>
    %14 = arith.maximumf %12, %13 : vector<10x384xf32>
    %c0_6 = arith.constant 0 : index
    %c0_7 = arith.constant 0 : index
    %15 = vector.load %arg3[%c0_6, %c0_7] : memref<10x384xf32, #tpu.memory_space<vmem>>, vector<10x384xf32>
    tpu.vector_store %arg3[%c0_6, %c0_7], %14 {strides = array<i32>} : memref<10x384xf32, #tpu.memory_space<vmem>>, vector<10x384xf32>,
    return
  }
}

module attributes {stable_mosaic.version = 11 : i64} {
  func.func @_conv_pool_relu_kernel(%arg0: memref<250x512xf32, #tpu.memory_space<vmem>>, %arg1: memref<20x250xf32, #tpu.memory_space<vmem>>, %arg2: memref<20x1xf32, #tpu.memory_space<vmem>>, %arg3: memref<20x128xf32, #tpu.memory_space<vmem>>) attributes {dimension_semantics = [], scalar_prefetch = 0 : i64, scratch_operands = 0 : i64, tpu.core_type = #tpu.core_type<tc>} {
    %c0 = arith.constant 0 : index
    %c0_0 = arith.constant 0 : index
    %0 = vector.load %arg1[%c0, %c0_0] : memref<20x250xf32, #tpu.memory_space<vmem>>, vector<20x250xf32>
    %c0_1 = arith.constant 0 : index
    %c0_2 = arith.constant 0 : index
    %1 = vector.load %arg0[%c0_1, %c0_2] : memref<250x512xf32, #tpu.memory_space<vmem>>, vector<250x512xf32>
    %cst = arith.constant dense<0.000000e+00> : vector<20x512xf32>
    %2 = tpu.matmul %0, %1, %cst {dimension_numbers = #tpu.dot_dimension_numbers<[1], [0], [0], [1], [0, 0, 1, 1], [], []>} : vector<20x250xf32>, vector<250x512xf32>, vector<20x512xf32> -> vector<20x512xf32>
    %3 = vector.extract_strided_slice %2 {offsets = [0, 0], sizes = [20, 128], strides = [1, 1]} : vector<20x512xf32> to vector<20x128xf32>
    %4 = vector.extract_strided_slice %2 {offsets = [0, 128], sizes = [20, 128], strides = [1, 1]} : vector<20x512xf32> to vector<20x128xf32>
    %5 = arith.maximumf %3, %4 : vector<20x128xf32>
    %6 = vector.extract_strided_slice %2 {offsets = [0, 256], sizes = [20, 128], strides = [1, 1]} : vector<20x512xf32> to vector<20x128xf32>
    %7 = vector.extract_strided_slice %2 {offsets = [0, 384], sizes = [20, 128], strides = [1, 1]} : vector<20x512xf32> to vector<20x128xf32>
    %8 = arith.maximumf %6, %7 : vector<20x128xf32>
    %9 = arith.maximumf %5, %8 : vector<20x128xf32>
    %c0_3 = arith.constant 0 : index
    %c0_4 = arith.constant 0 : index
    %10 = vector.load %arg2[%c0_3, %c0_4] : memref<20x1xf32, #tpu.memory_space<vmem>>, vector<20x1xf32>
    %11 = vector.broadcast %10 : vector<20x1xf32> to vector<20x128xf32>
    %12 = arith.addf %9, %11 : vector<20x128xf32>
    %cst_5 = arith.constant 0.000000e+00 : f32
    %13 = vector.broadcast %cst_5 : f32 to vector<20x128xf32>
    %14 = arith.maximumf %12, %13 : vector<20x128xf32>
    %c0_6 = arith.constant 0 : index
    %c0_7 = arith.constant 0 : index
    %15 = vector.load %arg3[%c0_6, %c0_7] : memref<20x128xf32, #tpu.memory_space<vmem>>, vector<20x128xf32>
    tpu.vector_store %arg3[%c0_6, %c0_7], %14 {strides = array<i32>} : memref<20x128xf32, #tpu.memory_space<vmem>>, vector<20x128xf32>,
    return
  }
}

module attributes {stable_mosaic.version = 11 : i64} {
  func.func @_head_kernel(%arg0: memref<2x320xf32, #tpu.memory_space<vmem>>, %arg1: memref<320x50xf32, #tpu.memory_space<vmem>>, %arg2: memref<1x50xf32, #tpu.memory_space<vmem>>, %arg3: memref<50x128xf32, #tpu.memory_space<vmem>>, %arg4: memref<1x128xf32, #tpu.memory_space<vmem>>, %arg5: memref<2x128xf32, #tpu.memory_space<vmem>>) attributes {dimension_semantics = [], scalar_prefetch = 0 : i64, scratch_operands = 0 : i64, tpu.core_type = #tpu.core_type<tc>} {
    %c0 = arith.constant 0 : index
    %c0_0 = arith.constant 0 : index
    %0 = vector.load %arg0[%c0, %c0_0] : memref<2x320xf32, #tpu.memory_space<vmem>>, vector<2x320xf32>
    %c0_1 = arith.constant 0 : index
    %c0_2 = arith.constant 0 : index
    %1 = vector.load %arg1[%c0_1, %c0_2] : memref<320x50xf32, #tpu.memory_space<vmem>>, vector<320x50xf32>
    %cst = arith.constant dense<0.000000e+00> : vector<2x50xf32>
    %2 = tpu.matmul %0, %1, %cst {dimension_numbers = #tpu.dot_dimension_numbers<[1], [0], [0], [1], [0, 0, 1, 1], [], []>} : vector<2x320xf32>, vector<320x50xf32>, vector<2x50xf32> -> vector<2x50xf32>
    %c0_3 = arith.constant 0 : index
    %c0_4 = arith.constant 0 : index
    %3 = vector.load %arg2[%c0_3, %c0_4] : memref<1x50xf32, #tpu.memory_space<vmem>>, vector<1x50xf32>
    %4 = vector.broadcast %3 : vector<1x50xf32> to vector<2x50xf32>
    %5 = arith.addf %2, %4 : vector<2x50xf32>
    %cst_5 = arith.constant 0.000000e+00 : f32
    %6 = vector.broadcast %cst_5 : f32 to vector<2x50xf32>
    %7 = arith.maximumf %5, %6 : vector<2x50xf32>
    %c0_6 = arith.constant 0 : index
    %c0_7 = arith.constant 0 : index
    %8 = vector.load %arg3[%c0_6, %c0_7] : memref<50x128xf32, #tpu.memory_space<vmem>>, vector<50x128xf32>
    %cst_8 = arith.constant dense<0.000000e+00> : vector<2x128xf32>
    %9 = tpu.matmul %7, %8, %cst_8 {dimension_numbers = #tpu.dot_dimension_numbers<[1], [0], [0], [1], [0, 0, 1, 1], [], []>} : vector<2x50xf32>, vector<50x128xf32>, vector<2x128xf32> -> vector<2x128xf32>
    %c0_9 = arith.constant 0 : index
    %c0_10 = arith.constant 0 : index
    %10 = vector.load %arg4[%c0_9, %c0_10] : memref<1x128xf32, #tpu.memory_space<vmem>>, vector<1x128xf32>
    %11 = vector.broadcast %10 : vector<1x128xf32> to vector<2x128xf32>
    %12 = arith.addf %9, %11 : vector<2x128xf32>
    %cst_11 = arith.constant dense<0xFF800000> : vector<128xf32>
    %13 = vector.multi_reduction <maximumf>, %12, %cst_11 [0] : vector<2x128xf32> to vector<128xf32>
    %14 = vector.shape_cast %13 : vector<128xf32> to vector<1x128xf32>
    %15 = vector.broadcast %14 : vector<1x128xf32> to vector<2x128xf32>
    %16 = arith.subf %12, %15 : vector<2x128xf32>
    %17 = math.exp %16 : vector<2x128xf32>
    %cst_12 = arith.constant dense<0.000000e+00> : vector<128xf32>
    %18 = vector.multi_reduction <add>, %17, %cst_12 [0] : vector<2x128xf32> to vector<128xf32>
    %19 = vector.shape_cast %18 : vector<128xf32> to vector<1x128xf32>
    %20 = math.log %19 : vector<1x128xf32>
    %21 = vector.broadcast %20 : vector<1x128xf32> to vector<2x128xf32>
    %22 = arith.subf %16, %21 : vector<2x128xf32>
    %c0_13 = arith.constant 0 : index
    %c0_14 = arith.constant 0 : index
    %23 = vector.load %arg5[%c0_13, %c0_14] : memref<2x128xf32, #tpu.memory_space<vmem>>, vector<2x128xf32>
    tpu.vector_store %arg5[%c0_13, %c0_14], %22 {strides = array<i32>} : memref<2x128xf32, #tpu.memory_space<vmem>>, vector<2x128xf32>,
    return
  }
}

</mosaic_0001>

<llo_original>
// kernel: net_forward.3
$region0: #{net_forward.3}
  #allocation0 [shape = 'u32[]', space=smem, size = 0x4, offset = 0x4, fixed_abs, tag = 'smem constant byte address 0x4 - core index']
  #allocation1 [shape = 'u32[144,128]{1,0:T(1,128)}', space=vmem, size = 0x12000, scoped, tag = 'internal scratch']
  %s0 = inlined_call_operand.vmem [shape: f32[25,1536], index: 0, kind: input, shape index: {}]
  %s1 = inlined_call_operand.vmem [shape: f32[10,25], index: 1, kind: input, shape index: {}]
  %s2 = inlined_call_operand.vmem [shape: f32[10,1], index: 2, kind: input, shape index: {}]
  %s3 = inlined_call_operand.vmem [shape: f32[10,384], index: 3, kind: output, shape index: {}]
  %s4 = sld [smem:[#allocation0]]
  $region22: #{net_forward.3} parent=0
    _
  %s6 = ssub.s32 1, %s4
  %s7 = scalar_select 0, %s6, %s4
  // Predicated region
  $region2: #{net_forward.3} parent=0 // pred_check
    _
  $region3: #{net_forward.3} parent=0 // pred_check_branch
    %9 = sbr.rel (0) target = $region5
  $region4: #{net_forward.3} parent=0 // pred_region
    _
  $region5: #{net_forward.3} parent=0 // pred_fallthru
    _
  // Predicated region
  $region6: #{net_forward.3} parent=0 // pred_check
    _
  $region7: #{net_forward.3} parent=0 // pred_check_branch
    %11 = sbr.rel (0) target = $region9
  $region8: #{net_forward.3} parent=0 // pred_region
    _
  $region9: #{net_forward.3} parent=0 // pred_fallthru
    _
  // Predicated region
  $region10: #{net_forward.3} parent=0 // pred_check
    _
  $region11: #{net_forward.3} parent=0 // pred_check_branch
    %13 = sbr.rel (0) target = $region13
  $region12: #{net_forward.3} parent=0 // pred_region
    _
  $region13: #{net_forward.3} parent=0 // pred_fallthru
    _
  %v14 = vld [vmem:[%s1] sm:$0xff]
  %v15 = vld [vmem:[%s1 + $0x8] sm:$0x3]
  %v16 = vld [vmem:[%s0] sm:$0xff]
  %v17 = vld [vmem:[%s0 + $0x8] sm:$0xff]
  %v18 = vld [vmem:[%s0 + $0x10] sm:$0xff]
  %v19 = vld [vmem:[%s0 + $0x18] sm:$0xff]
  %v20 = vld [vmem:[%s0 + $0x20] sm:$0xff]
  %v21 = vld [vmem:[%s0 + $0x28] sm:$0xff]
  %v22 = vld [vmem:[%s0 + $0x30] sm:$0xff]
  %v23 = vld [vmem:[%s0 + $0x38] sm:$0xff]
  %v24 = vld [vmem:[%s0 + $0x40] sm:$0xff]
  %v25 = vld [vmem:[%s0 + $0x48] sm:$0xff]
  %v26 = vld [vmem:[%s0 + $0x50] sm:$0xff]
  %v27 = vld [vmem:[%s0 + $0x58] sm:$0xff]
  %v28 = vld [vmem:[%s0 + $0x60] sm:$0xff]
  %v29 = vld [vmem:[%s0 + $0x68] sm:$0xff]
  %v30 = vld [vmem:[%s0 + $0x70] sm:$0xff]
  %v31 = vld [vmem:[%s0 + $0x78] sm:$0xff]
  %v32 = vld [vmem:[%s0 + $0x80] sm:$0xff]
  %v33 = vld [vmem:[%s0 + $0x88] sm:$0xff]
  %v34 = vld [vmem:[%s0 + $0x90] sm:$0xff]
  %v35 = vld [vmem:[%s0 + $0x98] sm:$0xff]
  %v36 = vld [vmem:[%s0 + $0xa0] sm:$0xff]
  %v37 = vld [vmem:[%s0 + $0xa8] sm:$0xff]
  %v38 = vld [vmem:[%s0 + $0xb0] sm:$0xff]
  %v39 = vld [vmem:[%s0 + $0xb8] sm:$0xff]
  %v40 = vld [vmem:[%s0 + $0xc0] sm:$0xff]
  %v41 = vld [vmem:[%s0 + $0xc8] sm:$0xff]
  %v42 = vld [vmem:[%s0 + $0xd0] sm:$0xff]
  %v43 = vld [vmem:[%s0 + $0xd8] sm:$0xff]
  %v44 = vld [vmem:[%s0 + $0xe0] sm:$0xff]
  %v45 = vld [vmem:[%s0 + $0xe8] sm:$0xff]
  %v46 = vld [vmem:[%s0 + $0xf0] sm:$0xff]
  %v47 = vld [vmem:[%s0 + $0xf8] sm:$0xff]
  %v48 = vld [vmem:[%s0 + $0x100] sm:$0xff]
  %v49 = vld [vmem:[%s0 + $0x108] sm:$0xff]
  %v50 = vld [vmem:[%s0 + $0x110] sm:$0xff]
  %v51 = vld [vmem:[%s0 + $0x118] sm:$0xff]
  %v52 = vld [vmem:[%s0 + $0x120] sm:$0x1]
  %v53 = vld [vmem:[%s0 + $0x128] sm:$0x1]
  %v54 = vld [vmem:[%s0 + $0x130] sm:$0x1]
  %v55 = vld [vmem:[%s0 + $0x138] sm:$0x1]
  %v56 = vld [vmem:[%s0 + $0x140] sm:$0x1]
  %v57 = vld [vmem:[%s0 + $0x148] sm:$0x1]
  %v58 = vld [vmem:[%s0 + $0x150] sm:$0x1]
  %v59 = vld [vmem:[%s0 + $0x158] sm:$0x1]
  %v60 = vld [vmem:[%s0 + $0x160] sm:$0x1]
  %v61 = vld [vmem:[%s0 + $0x168] sm:$0x1]
  %v62 = vld [vmem:[%s0 + $0x170] sm:$0x1]
  %v63 = vld [vmem:[%s0 + $0x178] sm:$0x1]
  %vm64 = vcmask 203776
  %v66 = vsel %vm64, %v14, 0
  %v69 = vsel %vm64, %v15, 0
  %vm71 = vcmask 1040384
  %v73 = vsel %vm71, %v52, 0
  %v76 = vsel %vm71, %v53, 0
  %v79 = vsel %vm71, %v54, 0
  %v82 = vsel %vm71, %v55, 0
  %v85 = vsel %vm71, %v56, 0
  %v88 = vsel %vm71, %v57, 0
  %v91 = vsel %vm71, %v58, 0
  %v94 = vsel %vm71, %v59, 0
  %v97 = vsel %vm71, %v60, 0
  %v100 = vsel %vm71, %v61, 0
  %v103 = vsel %vm71, %v62, 0
  %v106 = vsel %vm71, %v63, 0
  %108 = vmatprep.subr.mxu0 %v17
  %109 = vmatpush1.msra.mxu0 %v16
  %110 = vmatprep.subr.mxu0 %v29
  %111 = vmatpush1.msra.mxu0 %v28
  %112 = vmatprep.subr.mxu0 %v41
  %113 = vmatpush1.msra.mxu0 %v40
  %114 = vmatprep.subr.mxu0 %v76
  %115 = vmatpush1.msra.mxu0 %v73
  %116 = vmatprep.subr.mxu0 0.0
  %117 = vmatpush1.msra.mxu0 0.0
  %118 = vmatprep.subr.mxu0 0.0
  %119 = vmatpush1.msra.mxu0 0.0
  %120 = vmatprep.subr.mxu0 0.0
  %121 = vmatpush1.msra.mxu0 0.0
  %122 = vmatprep.subr.mxu0 0.0
  %123 = vmatpush1.msra.mxu0 0.0
  %124 = vmatprep.subr.mxu0 0.0
  %125 = vmatpush1.msra.mxu0 0.0
  %126 = vmatprep.subr.mxu0 0.0
  %127 = vmatpush1.msra.mxu0 0.0
  %128 = vmatprep.subr.mxu0 0.0
  %129 = vmatpush1.msra.mxu0 0.0
  %130 = vmatprep.subr.mxu0 0.0
  %131 = vmatpush1.msra.mxu0 0.0
  %132 = vmatprep.subr.mxu0 0.0
  %133 = vmatpush1.msra.mxu0 0.0
  %134 = vmatprep.subr.mxu0 0.0
  %135 = vmatpush1.msra.mxu0 0.0
  %136 = vmatprep.subr.mxu0 0.0
  %137 = vmatpush1.msra.mxu0 0.0
  %138 = vmatprep.subr.mxu0 0.0
  %139 = vmatpush1.msra.mxu0 0.0
  %140 = vmatprep.subr.mxu0 0.0
  %141 = vmatpush1.msra.mxu0 0.0
  %142 = vmatprep.subr.mxu0 0.0
  %143 = vmatpush1.msra.mxu0 0.0
  %144 = vmatprep.subr.mxu0 0.0
  %145 = vmatpush1.msra.mxu0 0.0
  %146 = vmatprep.subr.mxu0 0.0
  %147 = vmatpush1.msra.mxu0 0.0
  %148 = vmatprep.subr.mxu0 0.0
  %149 = vmatpush1.msra.mxu0 0.0
  %150 = vmatprep.subr.mxu0 0.0
  %151 = vmatpush1.msra.mxu0 0.0
  %152 = vmatprep.subr.mxu0 0.0
  %153 = vmatpush1.msra.mxu0 0.0
  %154 = vmatprep.subr.mxu0 0.0
  %155 = vmatpush1.msra.mxu0 0.0
  %156 = vmatprep.subr.mxu0 0.0
  %157 = vmatpush1.msra.mxu0 0.0
  %158 = vmatprep.subr.mxu0 0.0
  %159 = vmatpush1.msra.mxu0 0.0
  %160 = vmatprep.subr.mxu0 0.0
  %161 = vmatpush1.msra.mxu0 0.0
  %162 = vmatprep.subr.mxu0 0.0
  %163 = vmatpush1.msra.mxu0 0.0
  %164 = vmatprep.subr.mxu0 0.0
  %165 = vmatpush1.msra.mxu0 0.0
  %166 = vmatprep.subr.mxu0 0.0
  %167 = vmatpush1.msra.mxu0 0.0
  %168 = vmatprep.subr.mxu0 0.0
  %169 = vmatpush1.msra.mxu0 0.0
  %170 = vmatprep.subr.mxu0 0.0
  %171 = vmatpush1.msra.mxu0 0.0
  %172 = vmatprep.mubr.f32.mxu0 0.0
  %173 = vmatmul.mubr.f32.gmra.mrb[0].mxu0 %v66
  %v174 = vpop.f32.mrb[0].mxu0
  %v175 = vadd.f32 0.0, %v174
  %v176 = vpop.f32.mrb[0].mxu0
  %v177 = vadd.f32 0.0, %v176
  %178 = vmatprep.mubr.f32.mxu0 0.0
  %179 = vmatmul.mubr.f32.gmra.mrb[0].mxu0 %v69
  %v180 = vpop.f32.mrb[0].mxu0
  %v181 = vadd.f32 0.0, %v180
  %v182 = vpop.f32.mrb[0].mxu0
  %v183 = vadd.f32 0.0, %v182
  %184 = vdwg.mxu0
  %185 = vmatprep.subr.mxu0 %v19
  %186 = vmatpush1.msra.mxu0 %v18
  %187 = vmatprep.subr.mxu0 %v31
  %188 = vmatpush1.msra.mxu0 %v30
  %189 = vmatprep.subr.mxu0 %v43
  %190 = vmatpush1.msra.mxu0 %v42
  %191 = vmatprep.subr.mxu0 %v82
  %192 = vmatpush1.msra.mxu0 %v79
  %193 = vmatprep.subr.mxu0 0.0
  %194 = vmatpush1.msra.mxu0 0.0
  %195 = vmatprep.subr.mxu0 0.0
  %196 = vmatpush1.msra.mxu0 0.0
  %197 = vmatprep.subr.mxu0 0.0
  %198 = vmatpush1.msra.mxu0 0.0
  %199 = vmatprep.subr.mxu0 0.0
  %200 = vmatpush1.msra.mxu0 0.0
  %201 = vmatprep.subr.mxu0 0.0
  %202 = vmatpush1.msra.mxu0 0.0
  %203 = vmatprep.subr.mxu0 0.0
  %204 = vmatpush1.msra.mxu0 0.0
  %205 = vmatprep.subr.mxu0 0.0
  %206 = vmatpush1.msra.mxu0 0.0
  %207 = vmatprep.subr.mxu0 0.0
  %208 = vmatpush1.msra.mxu0 0.0
  %209 = vmatprep.subr.mxu0 0.0
  %210 = vmatpush1.msra.mxu0 0.0
  %211 = vmatprep.subr.mxu0 0.0
  %212 = vmatpush1.msra.mxu0 0.0
  %213 = vmatprep.subr.mxu0 0.0
  %214 = vmatpush1.msra.mxu0 0.0
  %215 = vmatprep.subr.mxu0 0.0
  %216 = vmatpush1.msra.mxu0 0.0
  %217 = vmatprep.subr.mxu0 0.0
  %218 = vmatpush1.msra.mxu0 0.0
  %219 = vmatprep.subr.mxu0 0.0
  %220 = vmatpush1.msra.mxu0 0.0
  %221 = vmatprep.subr.mxu0 0.0
  %222 = vmatpush1.msra.mxu0 0.0
  %223 = vmatprep.subr.mxu0 0.0
  %224 = vmatpush1.msra.mxu0 0.0
  %225 = vmatprep.subr.mxu0 0.0
  %226 = vmatpush1.msra.mxu0 0.0
  %227 = vmatprep.subr.mxu0 0.0
  %228 = vmatpush1.msra.mxu0 0.0
  %229 = vmatprep.subr.mxu0 0.0
  %230 = vmatpush1.msra.mxu0 0.0
  %231 = vmatprep.subr.mxu0 0.0
  %232 = vmatpush1.msra.mxu0 0.0
  %233 = vmatprep.subr.mxu0 0.0
  %234 = vmatpush1.msra.mxu0 0.0
  %235 = vmatprep.subr.mxu0 0.0
  %236 = vmatpush1.msra.mxu0 0.0
  %237 = vmatprep.subr.mxu0 0.0
  %238 = vmatpush1.msra.mxu0 0.0
  %239 = vmatprep.subr.mxu0 0.0
  %240 = vmatpush1.msra.mxu0 0.0
  %241 = vmatprep.subr.mxu0 0.0
  %242 = vmatpush1.msra.mxu0 0.0
  %243 = vmatprep.subr.mxu0 0.0
  %244 = vmatpush1.msra.mxu0 0.0
  %245 = vmatprep.subr.mxu0 0.0
  %246 = vmatpush1.msra.mxu0 0.0
  %247 = vmatprep.subr.mxu0 0.0
  %248 = vmatpush1.msra.mxu0 0.0
  %249 = vmatprep.mubr.f32.mxu0 0.0
  %250 = vmatmul.mubr.f32.gmra.mrb[0].mxu0 %v66
  %v251 = vpop.f32.mrb[0].mxu0
  %v252 = vadd.f32 0.0, %v251
  %v253 = vpop.f32.mrb[0].mxu0
  %v254 = vadd.f32 0.0, %v253
  %255 = vmatprep.mubr.f32.mxu0 0.0
  %256 = vmatmul.mubr.f32.gmra.mrb[0].mxu0 %v69
  %v257 = vpop.f32.mrb[0].mxu0
  %v258 = vadd.f32 0.0, %v257
  %v259 = vpop.f32.mrb[0].mxu0
  %v260 = vadd.f32 0.0, %v259
  %261 = vdwg.mxu0
  %262 = vmatprep.subr.mxu0 %v21
  %263 = vmatpush1.msra.mxu0 %v20
  %264 = vmatprep.subr.mxu0 %v33
  %265 = vmatpush1.msra.mxu0 %v32
  %266 = vmatprep.subr.mxu0 %v45
  %267 = vmatpush1.msra.mxu0 %v44
  %268 = vmatprep.subr.mxu0 %v88
  %269 = vmatpush1.msra.mxu0 %v85
  %270 = vmatprep.subr.mxu0 0.0
  %271 = vmatpush1.msra.mxu0 0.0
  %272 = vmatprep.subr.mxu0 0.0
  %273 = vmatpush1.msra.mxu0 0.0
  %274 = vmatprep.subr.mxu0 0.0
  %275 = vmatpush1.msra.mxu0 0.0
  %276 = vmatprep.subr.mxu0 0.0
  %277 = vmatpush1.msra.mxu0 0.0
  %278 = vmatprep.subr.mxu0 0.0
  %279 = vmatpush1.msra.mxu0 0.0
  %280 = vmatprep.subr.mxu0 0.0
  %281 = vmatpush1.msra.mxu0 0.0
  %282 = vmatprep.subr.mxu0 0.0
  %283 = vmatpush1.msra.mxu0 0.0
  %284 = vmatprep.subr.mxu0 0.0
  %285 = vmatpush1.msra.mxu0 0.0
  %286 = vmatprep.subr.mxu0 0.0
  %287 = vmatpush1.msra.mxu0 0.0
  %288 = vmatprep.subr.mxu0 0.0
  %289 = vmatpush1.msra.mxu0 0.0
  %290 = vmatprep.subr.mxu0 0.0
  %291 = vmatpush1.msra.mxu0 0.0
  %292 = vmatprep.subr.mxu0 0.0
  %293 = vmatpush1.msra.mxu0 0.0
  %294 = vmatprep.subr.mxu0 0.0
  %295 = vmatpush1.msra.mxu0 0.0
  %296 = vmatprep.subr.mxu0 0.0
  %297 = vmatpush1.msra.mxu0 0.0
  %298 = vmatprep.subr.mxu0 0.0
  %299 = vmatpush1.msra.mxu0 0.0
  %300 = vmatprep.subr.mxu0 0.0
  %301 = vmatpush1.msra.mxu0 0.0
  %302 = vmatprep.subr.mxu0 0.0
  %303 = vmatpush1.msra.mxu0 0.0
  %304 = vmatprep.subr.mxu0 0.0
  %305 = vmatpush1.msra.mxu0 0.0
  %306 = vmatprep.subr.mxu0 0.0
  %307 = vmatpush1.msra.mxu0 0.0
  %308 = vmatprep.subr.mxu0 0.0
  %309 = vmatpush1.msra.mxu0 0.0
  %310 = vmatprep.subr.mxu0 0.0
  %311 = vmatpush1.msra.mxu0 0.0
  %312 = vmatprep.subr.mxu0 0.0
  %313 = vmatpush1.msra.mxu0 0.0
  %314 = vmatprep.subr.mxu0 0.0
  %315 = vmatpush1.msra.mxu0 0.0
  %316 = vmatprep.subr.mxu0 0.0
  %317 = vmatpush1.msra.mxu0 0.0
  %318 = vmatprep.subr.mxu0 0.0
  %319 = vmatpush1.msra.mxu0 0.0
  %320 = vmatprep.subr.mxu0 0.0
  %321 = vmatpush1.msra.mxu0 0.0
  %322 = vmatprep.subr.mxu0 0.0
  %323 = vmatpush1.msra.mxu0 0.0
  %324 = vmatprep.subr.mxu0 0.0
  %325 = vmatpush1.msra.mxu0 0.0
  %326 = vmatprep.mubr.f32.mxu0 0.0
  %327 = vmatmul.mubr.f32.gmra.mrb[0].mxu0 %v66
  %v328 = vpop.f32.mrb[0].mxu0
  %v329 = vadd.f32 0.0, %v328
  %v330 = vpop.f32.mrb[0].mxu0
  %v331 = vadd.f32 0.0, %v330
  %332 = vmatprep.mubr.f32.mxu0 0.0
  %333 = vmatmul.mubr.f32.gmra.mrb[0].mxu0 %v69
  %v334 = vpop.f32.mrb[0].mxu0
  %v335 = vadd.f32 0.0, %v334
  %v336 = vpop.f32.mrb[0].mxu0
  %v337 = vadd.f32 0.0, %v336
  %338 = vdwg.mxu0
  %339 = vmatprep.subr.mxu0 %v23
  %340 = vmatpush1.msra.mxu0 %v22
  %341 = vmatprep.subr.mxu0 %v35
  %342 = vmatpush1.msra.mxu0 %v34
  %343 = vmatprep.subr.mxu0 %v47
  %344 = vmatpush1.msra.mxu0 %v46
  %345 = vmatprep.subr.mxu0 %v94
  %346 = vmatpush1.msra.mxu0 %v91
  %347 = vmatprep.subr.mxu0 0.0
  %348 = vmatpush1.msra.mxu0 0.0
  %349 = vmatprep.subr.mxu0 0.0
  %350 = vmatpush1.msra.mxu0 0.0
  %351 = vmatprep.subr.mxu0 0.0
  %352 = vmatpush1.msra.mxu0 0.0
  %353 = vmatprep.subr.mxu0 0.0
  %354 = vmatpush1.msra.mxu0 0.0
  %355 = vmatprep.subr.mxu0 0.0
  %356 = vmatpush1.msra.mxu0 0.0
  %357 = vmatprep.subr.mxu0 0.0
  %358 = vmatpush1.msra.mxu0 0.0
  %359 = vmatprep.subr.mxu0 0.0
  %360 = vmatpush1.msra.mxu0 0.0
  %361 = vmatprep.subr.mxu0 0.0
  %362 = vmatpush1.msra.mxu0 0.0
  %363 = vmatprep.subr.mxu0 0.0
  %364 = vmatpush1.msra.mxu0 0.0
  %365 = vmatprep.subr.mxu0 0.0
  %366 = vmatpush1.msra.mxu0 0.0
  %367 = vmatprep.subr.mxu0 0.0
  %368 = vmatpush1.msra.mxu0 0.0
  %369 = vmatprep.subr.mxu0 0.0
  %370 = vmatpush1.msra.mxu0 0.0
  %371 = vmatprep.subr.mxu0 0.0
  %372 = vmatpush1.msra.mxu0 0.0
  %373 = vmatprep.subr.mxu0 0.0
  %374 = vmatpush1.msra.mxu0 0.0
  %375 = vmatprep.subr.mxu0 0.0
  %376 = vmatpush1.msra.mxu0 0.0
  %377 = vmatprep.subr.mxu0 0.0
  %378 = vmatpush1.msra.mxu0 0.0
  %379 = vmatprep.subr.mxu0 0.0
  %380 = vmatpush1.msra.mxu0 0.0
  %381 = vmatprep.subr.mxu0 0.0
  %382 = vmatpush1.msra.mxu0 0.0
  %383 = vmatprep.subr.mxu0 0.0
  %384 = vmatpush1.msra.mxu0 0.0
  %385 = vmatprep.subr.mxu0 0.0
  %386 = vmatpush1.msra.mxu0 0.0
  %387 = vmatprep.subr.mxu0 0.0
  %388 = vmatpush1.msra.mxu0 0.0
  %389 = vmatprep.subr.mxu0 0.0
  %390 = vmatpush1.msra.mxu0 0.0
  %391 = vmatprep.subr.mxu0 0.0
  %392 = vmatpush1.msra.mxu0 0.0
  %393 = vmatprep.subr.mxu0 0.0
  %394 = vmatpush1.msra.mxu0 0.0
  %395 = vmatprep.subr.mxu0 0.0
  %396 = vmatpush1.msra.mxu0 0.0
  %397 = vmatprep.subr.mxu0 0.0
  %398 = vmatpush1.msra.mxu0 0.0
  %399 = vmatprep.subr.mxu0 0.0
  %400 = vmatpush1.msra.mxu0 0.0
  %401 = vmatprep.subr.mxu0 0.0
  %402 = vmatpush1.msra.mxu0 0.0
  %403 = vmatprep.mubr.f32.mxu0 0.0
  %404 = vmatmul.mubr.f32.gmra.mrb[0].mxu0 %v66
  %v405 = vpop.f32.mrb[0].mxu0
  %v406 = vadd.f32 0.0, %v405
  %v407 = vpop.f32.mrb[0].mxu0
  %v408 = vadd.f32 0.0, %v407
  %409 = vmatprep.mubr.f32.mxu0 0.0
  %410 = vmatmul.mubr.f32.gmra.mrb[0].mxu0 %v69
  %v411 = vpop.f32.mrb[0].mxu0
  %v412 = vadd.f32 0.0, %v411
  %v413 = vpop.f32.mrb[0].mxu0
  %v414 = vadd.f32 0.0, %v413
  %415 = vdwg.mxu0
  %416 = vmatprep.subr.mxu0 %v25
  %417 = vmatpush1.msra.mxu0 %v24
  %418 = vmatprep.subr.mxu0 %v37
  %419 = vmatpush1.msra.mxu0 %v36
  %420 = vmatprep.subr.mxu0 %v49
  %421 = vmatpush1.msra.mxu0 %v48
  %422 = vmatprep.subr.mxu0 %v100
  %423 = vmatpush1.msra.mxu0 %v97
  %424 = vmatprep.subr.mxu0 0.0
  %425 = vmatpush1.msra.mxu0 0.0
  %426 = vmatprep.subr.mxu0 0.0
  %427 = vmatpush1.msra.mxu0 0.0
  %428 = vmatprep.subr.mxu0 0.0
  %429 = vmatpush1.msra.mxu0 0.0
  %430 = vmatprep.subr.mxu0 0.0
  %431 = vmatpush1.msra.mxu0 0.0
  %432 = vmatprep.subr.mxu0 0.0
  %433 = vmatpush1.msra.mxu0 0.0
  %434 = vmatprep.subr.mxu0 0.0
  %435 = vmatpush1.msra.mxu0 0.0
  %436 = vmatprep.subr.mxu0 0.0
  %437 = vmatpush1.msra.mxu0 0.0
  %438 = vmatprep.subr.mxu0 0.0
  %439 = vmatpush1.msra.mxu0 0.0
  %440 = vmatprep.subr.mxu0 0.0
  %441 = vmatpush1.msra.mxu0 0.0
  %442 = vmatprep.subr.mxu0 0.0
  %443 = vmatpush1.msra.mxu0 0.0
  %444 = vmatprep.subr.mxu0 0.0
  %445 = vmatpush1.msra.mxu0 0.0
  %446 = vmatprep.subr.mxu0 0.0
  %447 = vmatpush1.msra.mxu0 0.0
  %448 = vmatprep.subr.mxu0 0.0
  %449 = vmatpush1.msra.mxu0 0.0
  %450 = vmatprep.subr.mxu0 0.0
  %451 = vmatpush1.msra.mxu0 0.0
  %452 = vmatprep.subr.mxu0 0.0
  %453 = vmatpush1.msra.mxu0 0.0
  %454 = vmatprep.subr.mxu0 0.0
  %455 = vmatpush1.msra.mxu0 0.0
  %456 = vmatprep.subr.mxu0 0.0
  %457 = vmatpush1.msra.mxu0 0.0
  %458 = vmatprep.subr.mxu0 0.0
  %459 = vmatpush1.msra.mxu0 0.0
  %460 = vmatprep.subr.mxu0 0.0
  %461 = vmatpush1.msra.mxu0 0.0
  %462 = vmatprep.subr.mxu0 0.0
  %463 = vmatpush1.msra.mxu0 0.0
  %464 = vmatprep.subr.mxu0 0.0
  %465 = vmatpush1.msra.mxu0 0.0
  %466 = vmatprep.subr.mxu0 0.0
  %467 = vmatpush1.msra.mxu0 0.0
  %468 = vmatprep.subr.mxu0 0.0
  %469 = vmatpush1.msra.mxu0 0.0
  %470 = vmatprep.subr.mxu0 0.0
  %471 = vmatpush1.msra.mxu0 0.0
  %472 = vmatprep.subr.mxu0 0.0
  %473 = vmatpush1.msra.mxu0 0.0
  %474 = vmatprep.subr.mxu0 0.0
  %475 = vmatpush1.msra.mxu0 0.0
  %476 = vmatprep.subr.mxu0 0.0
  %477 = vmatpush1.msra.mxu0 0.0
  %478 = vmatprep.subr.mxu0 0.0
  %479 = vmatpush1.msra.mxu0 0.0
  %480 = vmatprep.mubr.f32.mxu0 0.0
  %481 = vmatmul.mubr.f32.gmra.mrb[0].mxu0 %v66
  %v482 = vpop.f32.mrb[0].mxu0
  %v483 = vadd.f32 0.0, %v482
  %v484 = vpop.f32.mrb[0].mxu0
  %v485 = vadd.f32 0.0, %v484
  %486 = vmatprep.mubr.f32.mxu0 0.0
  %487 = vmatmul.mubr.f32.gmra.mrb[0].mxu0 %v69
  %v488 = vpop.f32.mrb[0].mxu0
  %v489 = vadd.f32 0.0, %v488
  %v490 = vpop.f32.mrb[0].mxu0
  %v491 = vadd.f32 0.0, %v490
  %492 = vdwg.mxu0
  %493 = vmatprep.subr.mxu0 %v27
  %494 = vmatpush1.msra.mxu0 %v26
  %495 = vmatprep.subr.mxu0 %v39
  %496 = vmatpush1.msra.mxu0 %v38
  %497 = vmatprep.subr.mxu0 %v51
  %498 = vmatpush1.msra.mxu0 %v50
  %499 = vmatprep.subr.mxu0 %v106
  %500 = vmatpush1.msra.mxu0 %v103
  %501 = vmatprep.subr.mxu0 0.0
  %502 = vmatpush1.msra.mxu0 0.0
  %503 = vmatprep.subr.mxu0 0.0
  %504 = vmatpush1.msra.mxu0 0.0
  %505 = vmatprep.subr.mxu0 0.0
  %506 = vmatpush1.msra.mxu0 0.0
  %507 = vmatprep.subr.mxu0 0.0
  %508 = vmatpush1.msra.mxu0 0.0
  %509 = vmatprep.subr.mxu0 0.0
  %510 = vmatpush1.msra.mxu0 0.0
  %511 = vmatprep.subr.mxu0 0.0
  %512 = vmatpush1.msra.mxu0 0.0
  %513 = vmatprep.subr.mxu0 0.0
  %514 = vmatpush1.msra.mxu0 0.0
  %515 = vmatprep.subr.mxu0 0.0
  %516 = vmatpush1.msra.mxu0 0.0
  %517 = vmatprep.subr.mxu0 0.0
  %518 = vmatpush1.msra.mxu0 0.0
  %519 = vmatprep.subr.mxu0 0.0
  %520 = vmatpush1.msra.mxu0 0.0
  %521 = vmatprep.subr.mxu0 0.0
  %522 = vmatpush1.msra.mxu0 0.0
  %523 = vmatprep.subr.mxu0 0.0
  %524 = vmatpush1.msra.mxu0 0.0
  %525 = vmatprep.subr.mxu0 0.0
  %526 = vmatpush1.msra.mxu0 0.0
  %527 = vmatprep.subr.mxu0 0.0
  %528 = vmatpush1.msra.mxu0 0.0
  %529 = vmatprep.subr.mxu0 0.0
  %530 = vmatpush1.msra.mxu0 0.0
  %531 = vmatprep.subr.mxu0 0.0
  %532 = vmatpush1.msra.mxu0 0.0
  %533 = vmatprep.subr.mxu0 0.0
  %534 = vmatpush1.msra.mxu0 0.0
  %535 = vmatprep.subr.mxu0 0.0
  %536 = vmatpush1.msra.mxu0 0.0
  %537 = vmatprep.subr.mxu0 0.0
  %538 = vmatpush1.msra.mxu0 0.0
  %539 = vmatprep.subr.mxu0 0.0
  %540 = vmatpush1.msra.mxu0 0.0
  %541 = vmatprep.subr.mxu0 0.0
  %542 = vmatpush1.msra.mxu0 0.0
  %543 = vmatprep.subr.mxu0 0.0
  %544 = vmatpush1.msra.mxu0 0.0
  %545 = vmatprep.subr.mxu0 0.0
  %546 = vmatpush1.msra.mxu0 0.0
  %547 = vmatprep.subr.mxu0 0.0
  %548 = vmatpush1.msra.mxu0 0.0
  %549 = vmatprep.subr.mxu0 0.0
  %550 = vmatpush1.msra.mxu0 0.0
  %551 = vmatprep.subr.mxu0 0.0
  %552 = vmatpush1.msra.mxu0 0.0
  %553 = vmatprep.subr.mxu0 0.0
  %554 = vmatpush1.msra.mxu0 0.0
  %555 = vmatprep.subr.mxu0 0.0
  %556 = vmatpush1.msra.mxu0 0.0
  %557 = vmatprep.mubr.f32.mxu0 0.0
  %558 = vmatmul.mubr.f32.gmra.mrb[0].mxu0 %v66
  %v559 = vpop.f32.mrb[0].mxu0
  %v560 = vadd.f32 0.0, %v559
  %v561 = vpop.f32.mrb[0].mxu0
  %v562 = vadd.f32 0.0, %v561
  %563 = vmatprep.mubr.f32.mxu0 0.0
  %564 = vmatmul.mubr.f32.gmra.mrb[0].mxu0 %v69
  %v565 = vpop.f32.mrb[0].mxu0
  %v566 = vadd.f32 0.0, %v565
  %v567 = vpop.f32.mrb[0].mxu0
  %v568 = vadd.f32 0.0, %v567
  %569 = vdwg.mxu0
  %v570 = vmax.f32 %v175, %v254
  %v571 = vmax.f32 %v177, %v329
  %v572 = vmax.f32 %v252, %v331
  %v573 = vmax.f32 %v181, %v260
  %v574 = vmax.f32 %v183, %v335
  %v575 = vmax.f32 %v258, %v337
  %v576 = vmax.f32 %v406, %v485
  %v577 = vmax.f32 %v408, %v560
  %v578 = vmax.f32 %v483, %v562
  %v579 = vmax.f32 %v412, %v491
  %v580 = vmax.f32 %v414, %v566
  %v581 = vmax.f32 %v489, %v568
  %v582 = vmax.f32 %v570, %v576
  %v583 = vmax.f32 %v571, %v577
  %v584 = vmax.f32 %v572, %v578
  %v585 = vmax.f32 %v573, %v579
  %v586 = vmax.f32 %v574, %v580
  %v587 = vmax.f32 %v575, %v581
  %v588 = vld [vmem:[%s2] sm:$0xff]
  %v589 = vld [vmem:[%s2 + $0x8] sm:$0x3]
  %591 = vset.pattern.permute.xlu0 0
  %592 = vperm.xlu0 %591, %v588
  %v593 = vpop.permute.xlu0 %592
  %596 = vset.pattern.permute.xlu0 0
  %597 = vperm.xlu0 %596, %v589
  %v598 = vpop.permute.xlu0 %597
  %v600 = vadd.f32 %v582, %v593
  %v601 = vadd.f32 %v583, %v593
  %v602 = vadd.f32 %v584, %v593
  %v603 = vadd.f32 %v585, %v598
  %v604 = vadd.f32 %v586, %v598
  %v605 = vadd.f32 %v587, %v598
  %v606 = vmax.f32 %v600, 0.0
  %v607 = vmax.f32 %v601, 0.0
  %v608 = vmax.f32 %v602, 0.0
  %v609 = vmax.f32 %v603, 0.0
  %v610 = vmax.f32 %v604, 0.0
  %v611 = vmax.f32 %v605, 0.0
  %612 = vst [vmem:[%s3] sm:$0xff] %v606
  %613 = vst [vmem:[%s3 + $0x8] sm:$0xff] %v607
  %614 = vst [vmem:[%s3 + $0x10] sm:$0xff] %v608
  %615 = vst [vmem:[%s3 + $0x18] sm:$0x3] %v609
  %616 = vst [vmem:[%s3 + $0x20] sm:$0x3] %v610
  %617 = vst [vmem:[%s3 + $0x28] sm:$0x3] %v611
  // Predicated region
  $region14: #{net_forward.3} parent=0 // pred_check
    _
  $region15: #{net_forward.3} parent=0 // pred_check_branch
    %619 = sbr.rel (0) target = $region17
  $region16: #{net_forward.3} parent=0 // pred_region
    _
  $region17: #{net_forward.3} parent=0 // pred_fallthru
    _
  // Predicated region
  $region18: #{net_forward.3} parent=0 // pred_check
    _
  $region19: #{net_forward.3} parent=0 // pred_check_branch
    %621 = sbr.rel (0) target = $region21
  $region20: #{net_forward.3} parent=0 // pred_region
    _
  $region21: #{net_forward.3} parent=0 // pred_fallthru
    _

// kernel: net_forward.4
$region0: #{net_forward.4}
  #allocation0 [shape = 'u32[]', space=smem, size = 0x4, offset = 0x4, fixed_abs, tag = 'smem constant byte address 0x4 - core index']
  #allocation1 [shape = 'u32[144,128]{1,0:T(1,128)}', space=vmem, size = 0x12000, scoped, tag = 'internal scratch']
  %s0 = inlined_call_operand.vmem [shape: f32[250,512], index: 0, kind: input, shape index: {}]
  %s1 = inlined_call_operand.vmem [shape: f32[20,250], index: 1, kind: input, shape index: {}]
  %s2 = inlined_call_operand.vmem [shape: f32[20,1], index: 2, kind: input, shape index: {}]
  %s3 = inlined_call_operand.vmem [shape: f32[20,128], index: 3, kind: output, shape index: {}]
  %s4 = sld [smem:[#allocation0]]
  $region22: #{net_forward.4} parent=0
    _
  %s6 = ssub.s32 1, %s4
  %s7 = scalar_select 0, %s6, %s4
  // Predicated region
  $region2: #{net_forward.4} parent=0 // pred_check
    _
  $region3: #{net_forward.4} parent=0 // pred_check_branch
    %9 = sbr.rel (0) target = $region5
  $region4: #{net_forward.4} parent=0 // pred_region
    _
  $region5: #{net_forward.4} parent=0 // pred_fallthru
    _
  // Predicated region
  $region6: #{net_forward.4} parent=0 // pred_check
    _
  $region7: #{net_forward.4} parent=0 // pred_check_branch
    %11 = sbr.rel (0) target = $region9
  $region8: #{net_forward.4} parent=0 // pred_region
    _
  $region9: #{net_forward.4} parent=0 // pred_fallthru
    _
  // Predicated region
  $region10: #{net_forward.4} parent=0 // pred_check
    _
  $region11: #{net_forward.4} parent=0 // pred_check_branch
    %13 = sbr.rel (0) target = $region13
  $region12: #{net_forward.4} parent=0 // pred_region
    _
  $region13: #{net_forward.4} parent=0 // pred_fallthru
    _
  %v14 = vld [vmem:[%s1] sm:$0xff]
  %v15 = vld [vmem:[%s1 + $0x8] sm:$0xff]
  %v16 = vld [vmem:[%s1 + $0x10] sm:$0xff]
  %v17 = vld [vmem:[%s1 + $0x18] sm:$0xff]
  %v18 = vld [vmem:[%s1 + $0x20] sm:$0xf]
  %v19 = vld [vmem:[%s1 + $0x28] sm:$0xf]
  %v20 = vld [vmem:[%s0] sm:$0xff]
  %v21 = vld [vmem:[%s0 + $0x8] sm:$0xff]
  %v22 = vld [vmem:[%s0 + $0x10] sm:$0xff]
  %v23 = vld [vmem:[%s0 + $0x18] sm:$0xff]
  %v24 = vld [vmem:[%s0 + $0x20] sm:$0xff]
  %v25 = vld [vmem:[%s0 + $0x28] sm:$0xff]
  %v26 = vld [vmem:[%s0 + $0x30] sm:$0xff]
  %v27 = vld [vmem:[%s0 + $0x38] sm:$0xff]
  %v28 = vld [vmem:[%s0 + $0x40] sm:$0xff]
  %v29 = vld [vmem:[%s0 + $0x48] sm:$0xff]
  %v30 = vld [vmem:[%s0 + $0x50] sm:$0xff]
  %v31 = vld [vmem:[%s0 + $0x58] sm:$0xff]
  %v32 = vld [vmem:[%s0 + $0x60] sm:$0xff]
  %v33 = vld [vmem:[%s0 + $0x68] sm:$0xff]
  %v34 = vld [vmem:[%s0 + $0x70] sm:$0xff]
  %v35 = vld [vmem:[%s0 + $0x78] sm:$0xff]
  %v36 = vld [vmem:[%s0 + $0x80] sm:$0xff]
  %v37 = vld [vmem:[%s0 + $0x88] sm:$0xff]
  %v38 = vld [vmem:[%s0 + $0x90] sm:$0xff]
  %v39 = vld [vmem:[%s0 + $0x98] sm:$0xff]
  %v40 = vld [vmem:[%s0 + $0xa0] sm:$0xff]
  %v41 = vld [vmem:[%s0 + $0xa8] sm:$0xff]
  %v42 = vld [vmem:[%s0 + $0xb0] sm:$0xff]
  %v43 = vld [vmem:[%s0 + $0xb8] sm:$0xff]
  %v44 = vld [vmem:[%s0 + $0xc0] sm:$0xff]
  %v45 = vld [vmem:[%s0 + $0xc8] sm:$0xff]
  %v46 = vld [vmem:[%s0 + $0xd0] sm:$0xff]
  %v47 = vld [vmem:[%s0 + $0xd8] sm:$0xff]
  %v48 = vld [vmem:[%s0 + $0xe0] sm:$0xff]
  %v49 = vld [vmem:[%s0 + $0xe8] sm:$0xff]
  %v50 = vld [vmem:[%s0 + $0xf0] sm:$0xff]
  %v51 = vld [vmem:[%s0 + $0xf8] sm:$0xff]
  %v52 = vld [vmem:[%s0 + $0x100] sm:$0xff]
  %v53 = vld [vmem:[%s0 + $0x108] sm:$0xff]
  %v54 = vld [vmem:[%s0 + $0x110] sm:$0xff]
  %v55 = vld [vmem:[%s0 + $0x118] sm:$0xff]
  %v56 = vld [vmem:[%s0 + $0x120] sm:$0xff]
  %v57 = vld [vmem:[%s0 + $0x128] sm:$0xff]
  %v58 = vld [vmem:[%s0 + $0x130] sm:$0xff]
  %v59 = vld [vmem:[%s0 + $0x138] sm:$0xff]
  %v60 = vld [vmem:[%s0 + $0x140] sm:$0xff]
  %v61 = vld [vmem:[%s0 + $0x148] sm:$0xff]
  %v62 = vld [vmem:[%s0 + $0x150] sm:$0xff]
  %v63 = vld [vmem:[%s0 + $0x158] sm:$0xff]
  %v64 = vld [vmem:[%s0 + $0x160] sm:$0xff]
  %v65 = vld [vmem:[%s0 + $0x168] sm:$0xff]
  %v66 = vld [vmem:[%s0 + $0x170] sm:$0xff]
  %v67 = vld [vmem:[%s0 + $0x178] sm:$0xff]
  %v68 = vld [vmem:[%s0 + $0x180] sm:$0xff]
  %v69 = vld [vmem:[%s0 + $0x188] sm:$0xff]
  %v70 = vld [vmem:[%s0 + $0x190] sm:$0xff]
  %v71 = vld [vmem:[%s0 + $0x198] sm:$0xff]
  %v72 = vld [vmem:[%s0 + $0x1a0] sm:$0xff]
  %v73 = vld [vmem:[%s0 + $0x1a8] sm:$0xff]
  %v74 = vld [vmem:[%s0 + $0x1b0] sm:$0xff]
  %v75 = vld [vmem:[%s0 + $0x1b8] sm:$0xff]
  %v76 = vld [vmem:[%s0 + $0x1c0] sm:$0xff]
  %v77 = vld [vmem:[%s0 + $0x1c8] sm:$0xff]
  %v78 = vld [vmem:[%s0 + $0x1d0] sm:$0xff]
  %v79 = vld [vmem:[%s0 + $0x1d8] sm:$0xff]
  %v80 = vld [vmem:[%s0 + $0x1e0] sm:$0xff]
  %v81 = vld [vmem:[%s0 + $0x1e8] sm:$0xff]
  %v82 = vld [vmem:[%s0 + $0x1f0] sm:$0xff]
  %v83 = vld [vmem:[%s0 + $0x1f8] sm:$0xff]
  %v84 = vld [vmem:[%s0 + $0x200] sm:$0xff]
  %v85 = vld [vmem:[%s0 + $0x208] sm:$0xff]
  %v86 = vld [vmem:[%s0 + $0x210] sm:$0xff]
  %v87 = vld [vmem:[%s0 + $0x218] sm:$0xff]
  %v88 = vld [vmem:[%s0 + $0x220] sm:$0xff]
  %v89 = vld [vmem:[%s0 + $0x228] sm:$0xff]
  %v90 = vld [vmem:[%s0 + $0x230] sm:$0xff]
  %v91 = vld [vmem:[%s0 + $0x238] sm:$0xff]
  %v92 = vld [vmem:[%s0 + $0x240] sm:$0xff]
  %v93 = vld [vmem:[%s0 + $0x248] sm:$0xff]
  %v94 = vld [vmem:[%s0 + $0x250] sm:$0xff]
  %v95 = vld [vmem:[%s0 + $0x258] sm:$0xff]
  %v96 = vld [vmem:[%s0 + $0x260] sm:$0xff]
  %v97 = vld [vmem:[%s0 + $0x268] sm:$0xff]
  %v98 = vld [vmem:[%s0 + $0x270] sm:$0xff]
  %v99 = vld [vmem:[%s0 + $0x278] sm:$0xff]
  %v100 = vld [vmem:[%s0 + $0x280] sm:$0xff]
  %v101 = vld [vmem:[%s0 + $0x288] sm:$0xff]
  %v102 = vld [vmem:[%s0 + $0x290] sm:$0xff]
  %v103 = vld [vmem:[%s0 + $0x298] sm:$0xff]
  %v104 = vld [vmem:[%s0 + $0x2a0] sm:$0xff]
  %v105 = vld [vmem:[%s0 + $0x2a8] sm:$0xff]
  %v106 = vld [vmem:[%s0 + $0x2b0] sm:$0xff]
  %v107 = vld [vmem:[%s0 + $0x2b8] sm:$0xff]
  %v108 = vld [vmem:[%s0 + $0x2c0] sm:$0xff]
  %v109 = vld [vmem:[%s0 + $0x2c8] sm:$0xff]
  %v110 = vld [vmem:[%s0 + $0x2d0] sm:$0xff]
  %v111 = vld [vmem:[%s0 + $0x2d8] sm:$0xff]
  %v112 = vld [vmem:[%s0 + $0x2e0] sm:$0xff]
  %v113 = vld [vmem:[%s0 + $0x2e8] sm:$0xff]
  %v114 = vld [vmem:[%s0 + $0x2f0] sm:$0xff]
  %v115 = vld [vmem:[%s0 + $0x2f8] sm:$0xff]
  %v116 = vld [vmem:[%s0 + $0x300] sm:$0xff]
  %v117 = vld [vmem:[%s0 + $0x308] sm:$0xff]
  %v118 = vld [vmem:[%s0 + $0x310] sm:$0xff]
  %v119 = vld [vmem:[%s0 + $0x318] sm:$0xff]
  %v120 = vld [vmem:[%s0 + $0x320] sm:$0xff]
  %v121 = vld [vmem:[%s0 + $0x328] sm:$0xff]
  %v122 = vld [vmem:[%s0 + $0x330] sm:$0xff]
  %v123 = vld [vmem:[%s0 + $0x338] sm:$0xff]
  %v124 = vld [vmem:[%s0 + $0x340] sm:$0xff]
  %v125 = vld [vmem:[%s0 + $0x348] sm:$0xff]
  %v126 = vld [vmem:[%s0 + $0x350] sm:$0xff]
  %v127 = vld [vmem:[%s0 + $0x358] sm:$0xff]
  %v128 = vld [vmem:[%s0 + $0x360] sm:$0xff]
  %v129 = vld [vmem:[%s0 + $0x368] sm:$0xff]
  %v130 = vld [vmem:[%s0 + $0x370] sm:$0xff]
  %v131 = vld [vmem:[%s0 + $0x378] sm:$0xff]
  %v132 = vld [vmem:[%s0 + $0x380] sm:$0xff]
  %v133 = vld [vmem:[%s0 + $0x388] sm:$0xff]
  %v134 = vld [vmem:[%s0 + $0x390] sm:$0xff]
  %v135 = vld [vmem:[%s0 + $0x398] sm:$0xff]
  %v136 = vld [vmem:[%s0 + $0x3a0] sm:$0xff]
  %v137 = vld [vmem:[%s0 + $0x3a8] sm:$0xff]
  %v138 = vld [vmem:[%s0 + $0x3b0] sm:$0xff]
  %v139 = vld [vmem:[%s0 + $0x3b8] sm:$0xff]
  %v140 = vld [vmem:[%s0 + $0x3c0] sm:$0xff]
  %v141 = vld [vmem:[%s0 + $0x3c8] sm:$0xff]
  %v142 = vld [vmem:[%s0 + $0x3d0] sm:$0xff]
  %v143 = vld [vmem:[%s0 + $0x3d8] sm:$0xff]
  %v144 = vld [vmem:[%s0 + $0x3e0] sm:$0x3]
  %v145 = vld [vmem:[%s0 + $0x3e8] sm:$0x3]
  %v146 = vld [vmem:[%s0 + $0x3f0] sm:$0x3]
  %v147 = vld [vmem:[%s0 + $0x3f8] sm:$0x3]
  %vm148 = vcmask 998400
  %v150 = vsel %vm148, %v15, 0
  %v153 = vsel %vm148, %v17, 0
  %v156 = vsel %vm148, %v19, 0
  %vm158 = vcmask 1041408
  %v160 = vsel %vm158, %v144, 0
  %v163 = vsel %vm158, %v145, 0
  %v166 = vsel %vm158, %v146, 0
  %v169 = vsel %vm158, %v147, 0
  %171 = vmatprep.subr.mxu0 %v21
  %172 = vmatpush1.msra.mxu0 %v20
  %173 = vmatprep.subr.mxu0 %v25
  %174 = vmatpush1.msra.mxu0 %v24
  %175 = vmatprep.subr.mxu0 %v29
  %176 = vmatpush1.msra.mxu0 %v28
  %177 = vmatprep.subr.mxu0 %v33
  %178 = vmatpush1.msra.mxu0 %v32
  %179 = vmatprep.subr.mxu0 %v37
  %180 = vmatpush1.msra.mxu0 %v36
  %181 = vmatprep.subr.mxu0 %v41
  %182 = vmatpush1.msra.mxu0 %v40
  %183 = vmatprep.subr.mxu0 %v45
  %184 = vmatpush1.msra.mxu0 %v44
  %185 = vmatprep.subr.mxu0 %v49
  %186 = vmatpush1.msra.mxu0 %v48
  %187 = vmatprep.subr.mxu0 %v53
  %188 = vmatpush1.msra.mxu0 %v52
  %189 = vmatprep.subr.mxu0 %v57
  %190 = vmatpush1.msra.mxu0 %v56
  %191 = vmatprep.subr.mxu0 %v61
  %192 = vmatpush1.msra.mxu0 %v60
  %193 = vmatprep.subr.mxu0 %v65
  %194 = vmatpush1.msra.mxu0 %v64
  %195 = vmatprep.subr.mxu0 %v69
  %196 = vmatpush1.msra.mxu0 %v68
  %197 = vmatprep.subr.mxu0 %v73
  %198 = vmatpush1.msra.mxu0 %v72
  %199 = vmatprep.subr.mxu0 %v77
  %200 = vmatpush1.msra.mxu0 %v76
  %201 = vmatprep.subr.mxu0 %v81
  %202 = vmatpush1.msra.mxu0 %v80
  %203 = vmatprep.subr.mxu0 %v85
  %204 = vmatpush1.msra.mxu0 %v84
  %205 = vmatprep.subr.mxu0 %v89
  %206 = vmatpush1.msra.mxu0 %v88
  %207 = vmatprep.subr.mxu0 %v93
  %208 = vmatpush1.msra.mxu0 %v92
  %209 = vmatprep.subr.mxu0 %v97
  %210 = vmatpush1.msra.mxu0 %v96
  %211 = vmatprep.subr.mxu0 %v101
  %212 = vmatpush1.msra.mxu0 %v100
  %213 = vmatprep.subr.mxu0 %v105
  %214 = vmatpush1.msra.mxu0 %v104
  %215 = vmatprep.subr.mxu0 %v109
  %216 = vmatpush1.msra.mxu0 %v108
  %217 = vmatprep.subr.mxu0 %v113
  %218 = vmatpush1.msra.mxu0 %v112
  %219 = vmatprep.subr.mxu0 %v117
  %220 = vmatpush1.msra.mxu0 %v116
  %221 = vmatprep.subr.mxu0 %v121
  %222 = vmatpush1.msra.mxu0 %v120
  %223 = vmatprep.subr.mxu0 %v125
  %224 = vmatpush1.msra.mxu0 %v124
  %225 = vmatprep.subr.mxu0 %v129
  %226 = vmatpush1.msra.mxu0 %v128
  %227 = vmatprep.subr.mxu0 %v133
  %228 = vmatpush1.msra.mxu0 %v132
  %229 = vmatprep.subr.mxu0 %v137
  %230 = vmatpush1.msra.mxu0 %v136
  %231 = vmatprep.subr.mxu0 %v141
  %232 = vmatpush1.msra.mxu0 %v140
  %233 = vmatprep.subr.mxu0 %v163
  %234 = vmatpush1.msra.mxu0 %v160
  %235 = vmatprep.mubr.f32.mxu0 %v150
  %236 = vmatmul.mubr.f32.gmra.mrb[0].mxu0 %v14
  %v237 = vpop.f32.mrb[0].mxu0
  %v238 = vadd.f32 0.0, %v237
  %v239 = vpop.f32.mrb[0].mxu0
  %v240 = vadd.f32 0.0, %v239
  %241 = vmatprep.mubr.f32.mxu0 %v153
  %242 = vmatmul.mubr.f32.gmra.mrb[0].mxu0 %v16
  %v243 = vpop.f32.mrb[0].mxu0
  %v244 = vadd.f32 0.0, %v243
  %v245 = vpop.f32.mrb[0].mxu0
  %v246 = vadd.f32 0.0, %v245
  %247 = vmatprep.mubr.f32.mxu0 %v156
  %248 = vmatmul.mubr.f32.gmra.mrb[0].mxu0 %v18
  %v249 = vpop.f32.mrb[0].mxu0
  %v250 = vadd.f32 0.0, %v249
  %v251 = vpop.f32.mrb[0].mxu0
  %v252 = vadd.f32 0.0, %v251
  %253 = vdwg.mxu0
  %254 = vmatprep.subr.mxu0 %v23
  %255 = vmatpush1.msra.mxu0 %v22
  %256 = vmatprep.subr.mxu0 %v27
  %257 = vmatpush1.msra.mxu0 %v26
  %258 = vmatprep.subr.mxu0 %v31
  %259 = vmatpush1.msra.mxu0 %v30
  %260 = vmatprep.subr.mxu0 %v35
  %261 = vmatpush1.msra.mxu0 %v34
  %262 = vmatprep.subr.mxu0 %v39
  %263 = vmatpush1.msra.mxu0 %v38
  %264 = vmatprep.subr.mxu0 %v43
  %265 = vmatpush1.msra.mxu0 %v42
  %266 = vmatprep.subr.mxu0 %v47
  %267 = vmatpush1.msra.mxu0 %v46
  %268 = vmatprep.subr.mxu0 %v51
  %269 = vmatpush1.msra.mxu0 %v50
  %270 = vmatprep.subr.mxu0 %v55
  %271 = vmatpush1.msra.mxu0 %v54
  %272 = vmatprep.subr.mxu0 %v59
  %273 = vmatpush1.msra.mxu0 %v58
  %274 = vmatprep.subr.mxu0 %v63
  %275 = vmatpush1.msra.mxu0 %v62
  %276 = vmatprep.subr.mxu0 %v67
  %277 = vmatpush1.msra.mxu0 %v66
  %278 = vmatprep.subr.mxu0 %v71
  %279 = vmatpush1.msra.mxu0 %v70
  %280 = vmatprep.subr.mxu0 %v75
  %281 = vmatpush1.msra.mxu0 %v74
  %282 = vmatprep.subr.mxu0 %v79
  %283 = vmatpush1.msra.mxu0 %v78
  %284 = vmatprep.subr.mxu0 %v83
  %285 = vmatpush1.msra.mxu0 %v82
  %286 = vmatprep.subr.mxu0 %v87
  %287 = vmatpush1.msra.mxu0 %v86
  %288 = vmatprep.subr.mxu0 %v91
  %289 = vmatpush1.msra.mxu0 %v90
  %290 = vmatprep.subr.mxu0 %v95
  %291 = vmatpush1.msra.mxu0 %v94
  %292 = vmatprep.subr.mxu0 %v99
  %293 = vmatpush1.msra.mxu0 %v98
  %294 = vmatprep.subr.mxu0 %v103
  %295 = vmatpush1.msra.mxu0 %v102
  %296 = vmatprep.subr.mxu0 %v107
  %297 = vmatpush1.msra.mxu0 %v106
  %298 = vmatprep.subr.mxu0 %v111
  %299 = vmatpush1.msra.mxu0 %v110
  %300 = vmatprep.subr.mxu0 %v115
  %301 = vmatpush1.msra.mxu0 %v114
  %302 = vmatprep.subr.mxu0 %v119
  %303 = vmatpush1.msra.mxu0 %v118
  %304 = vmatprep.subr.mxu0 %v123
  %305 = vmatpush1.msra.mxu0 %v122
  %306 = vmatprep.subr.mxu0 %v127
  %307 = vmatpush1.msra.mxu0 %v126
  %308 = vmatprep.subr.mxu0 %v131
  %309 = vmatpush1.msra.mxu0 %v130
  %310 = vmatprep.subr.mxu0 %v135
  %311 = vmatpush1.msra.mxu0 %v134
  %312 = vmatprep.subr.mxu0 %v139
  %313 = vmatpush1.msra.mxu0 %v138
  %314 = vmatprep.subr.mxu0 %v143
  %315 = vmatpush1.msra.mxu0 %v142
  %316 = vmatprep.subr.mxu0 %v169
  %317 = vmatpush1.msra.mxu0 %v166
  %318 = vmatprep.mubr.f32.mxu0 %v150
  %319 = vmatmul.mubr.f32.gmra.mrb[0].mxu0 %v14
  %v320 = vpop.f32.mrb[0].mxu0
  %v321 = vadd.f32 0.0, %v320
  %v322 = vpop.f32.mrb[0].mxu0
  %v323 = vadd.f32 0.0, %v322
  %324 = vmatprep.mubr.f32.mxu0 %v153
  %325 = vmatmul.mubr.f32.gmra.mrb[0].mxu0 %v16
  %v326 = vpop.f32.mrb[0].mxu0
  %v327 = vadd.f32 0.0, %v326
  %v328 = vpop.f32.mrb[0].mxu0
  %v329 = vadd.f32 0.0, %v328
  %330 = vmatprep.mubr.f32.mxu0 %v156
  %331 = vmatmul.mubr.f32.gmra.mrb[0].mxu0 %v18
  %v332 = vpop.f32.mrb[0].mxu0
  %v333 = vadd.f32 0.0, %v332
  %v334 = vpop.f32.mrb[0].mxu0
  %v335 = vadd.f32 0.0, %v334
  %336 = vdwg.mxu0
  %v337 = vmax.f32 %v238, %v240
  %v338 = vmax.f32 %v244, %v246
  %v339 = vmax.f32 %v250, %v252
  %v340 = vmax.f32 %v321, %v323
  %v341 = vmax.f32 %v327, %v329
  %v342 = vmax.f32 %v333, %v335
  %v343 = vmax.f32 %v337, %v340
  %v344 = vmax.f32 %v338, %v341
  %v345 = vmax.f32 %v339, %v342
  %v346 = vld [vmem:[%s2] sm:$0xff]
  %v347 = vld [vmem:[%s2 + $0x8] sm:$0xff]
  %v348 = vld [vmem:[%s2 + $0x10] sm:$0xf]
  %350 = vset.pattern.permute.xlu0 0
  %351 = vperm.xlu0 %350, %v346
  %v352 = vpop.permute.xlu0 %351
  %355 = vset.pattern.permute.xlu0 0
  %356 = vperm.xlu0 %355, %v347
  %v357 = vpop.permute.xlu0 %356
  %360 = vset.pattern.permute.xlu0 0
  %361 = vperm.xlu0 %360, %v348
  %v362 = vpop.permute.xlu0 %361
  %v364 = vadd.f32 %v343, %v352
  %v365 = vadd.f32 %v344, %v357
  %v366 = vadd.f32 %v345, %v362
  %v367 = vmax.f32 %v364, 0.0
  %v368 = vmax.f32 %v365, 0.0
  %v369 = vmax.f32 %v366, 0.0
  %370 = vst [vmem:[%s3] sm:$0xff] %v367
  %371 = vst [vmem:[%s3 + $0x8] sm:$0xff] %v368
  %372 = vst [vmem:[%s3 + $0x10] sm:$0xf] %v369
  // Predicated region
  $region14: #{net_forward.4} parent=0 // pred_check
    _
  $region15: #{net_forward.4} parent=0 // pred_check_branch
    %374 = sbr.rel (0) target = $region17
  $region16: #{net_forward.4} parent=0 // pred_region
    _
  $region17: #{net_forward.4} parent=0 // pred_fallthru
    _
  // Predicated region
  $region18: #{net_forward.4} parent=0 // pred_check
    _
  $region19: #{net_forward.4} parent=0 // pred_check_branch
    %376 = sbr.rel (0) target = $region21
  $region20: #{net_forward.4} parent=0 // pred_region
    _
  $region21: #{net_forward.4} parent=0 // pred_fallthru
    _

// kernel: net_forward.5
$region0: #{net_forward.5}
  #allocation0 [shape = 'u32[]', space=smem, size = 0x4, offset = 0x4, fixed_abs, tag = 'smem constant byte address 0x4 - core index']
  #allocation1 [shape = 'u32[144,128]{1,0:T(1,128)}', space=vmem, size = 0x12000, scoped, tag = 'internal scratch']
  %s0 = inlined_call_operand.vmem [shape: f32[2,320], index: 0, kind: input, shape index: {}]
  %s1 = inlined_call_operand.vmem [shape: f32[320,50], index: 1, kind: input, shape index: {}]
  %s2 = inlined_call_operand.vmem [shape: f32[1,50], index: 2, kind: input, shape index: {}]
  %s3 = inlined_call_operand.vmem [shape: f32[50,128], index: 3, kind: input, shape index: {}]
  %s4 = inlined_call_operand.vmem [shape: f32[1,128], index: 4, kind: input, shape index: {}]
  %s5 = inlined_call_operand.hbm [shape: f32[2,128], index: 5, kind: output, shape index: {}]
  %s6 = sld [smem:[#allocation0]]
  $region30: #{net_forward.5} parent=0
    _
  %s8 = ssub.s32 1, %s6
  %s9 = scalar_select 0, %s8, %s6
  $region1: #{net_forward.5} parent=0
    #allocation2 [shape = 'u8[1024]{0}', space=vmem, size = 0x400, scoped, tag = 'output window, operand 0, single buffered']
    #allocation3 [shape = 's32[1]{0}', space=sflag, size = 0x4, scoped, tag = 'scoped memory for net_forward.5']
    %10 = vsyncpa [#allocation3], 0
    // Predicated region
    $region2: #{net_forward.5} parent=1 // pred_check
      _
    $region3: #{net_forward.5} parent=1 // pred_check_branch
      %12 = sbr.rel (0) target = $region5
    $region4: #{net_forward.5} parent=1 // pred_region
      _
    $region5: #{net_forward.5} parent=1 // pred_fallthru
      _
    // Predicated region
    $region6: #{net_forward.5} parent=1 // pred_check
      _
    $region7: #{net_forward.5} parent=1 // pred_check_branch
      %14 = sbr.rel (0) target = $region9
    $region8: #{net_forward.5} parent=1 // pred_region
      _
    $region9: #{net_forward.5} parent=1 // pred_fallthru
      _
    // Predicated region
    $region10: #{net_forward.5} parent=1 // pred_check
      _
    $region11: #{net_forward.5} parent=1 // pred_check_branch
      %16 = sbr.rel (0) target = $region13
    $region12: #{net_forward.5} parent=1 // pred_region
      _
    $region13: #{net_forward.5} parent=1 // pred_fallthru
      _
    // Predicated region
    $region14: #{net_forward.5} parent=1 // pred_check
      _
    $region15: #{net_forward.5} parent=1 // pred_check_branch
      %18 = sbr.rel (0) target = $region17
    $region16: #{net_forward.5} parent=1 // pred_region
      _
    $region17: #{net_forward.5} parent=1 // pred_fallthru
      _
    // Predicated region
    $region18: #{net_forward.5} parent=1 // pred_check
      _
    $region19: #{net_forward.5} parent=1 // pred_check_branch
      %20 = sbr.rel (0) target = $region21
    $region20: #{net_forward.5} parent=1 // pred_region
      _
    $region21: #{net_forward.5} parent=1 // pred_fallthru
      _
    %v21 = vld [vmem:[%s0] sm:$0x3f]
    %v22 = vld [vmem:[%s1] sm:$0xff]
    %v23 = vld [vmem:[%s1 + $0x8] sm:$0xff]
    %v24 = vld [vmem:[%s1 + $0x10] sm:$0xff]
    %v25 = vld [vmem:[%s1 + $0x18] sm:$0xff]
    %v26 = vld [vmem:[%s1 + $0x20] sm:$0xff]
    %v27 = vld [vmem:[%s1 + $0x28] sm:$0xff]
    %v28 = vld [vmem:[%s1 + $0x30] sm:$0xff]
    %v29 = vld [vmem:[%s1 + $0x38] sm:$0xff]
    %v30 = vld [vmem:[%s1 + $0x40] sm:$0xff]
    %v31 = vld [vmem:[%s1 + $0x48] sm:$0xff]
    %v32 = vld [vmem:[%s1 + $0x50] sm:$0xff]
    %v33 = vld [vmem:[%s1 + $0x58] sm:$0xff]
    %v34 = vld [vmem:[%s1 + $0x60] sm:$0xff]
    %v35 = vld [vmem:[%s1 + $0x68] sm:$0xff]
    %v36 = vld [vmem:[%s1 + $0x70] sm:$0xff]
    %v37 = vld [vmem:[%s1 + $0x78] sm:$0xff]
    %v38 = vld [vmem:[%s1 + $0x80] sm:$0xff]
    %v39 = vld [vmem:[%s1 + $0x88] sm:$0xff]
    %v40 = vld [vmem:[%s1 + $0x90] sm:$0xff]
    %v41 = vld [vmem:[%s1 + $0x98] sm:$0xff]
    %v42 = vld [vmem:[%s1 + $0xa0] sm:$0xff]
    %v43 = vld [vmem:[%s1 + $0xa8] sm:$0xff]
    %v44 = vld [vmem:[%s1 + $0xb0] sm:$0xff]
    %v45 = vld [vmem:[%s1 + $0xb8] sm:$0xff]
    %v46 = vld [vmem:[%s1 + $0xc0] sm:$0xff]
    %v47 = vld [vmem:[%s1 + $0xc8] sm:$0xff]
    %v48 = vld [vmem:[%s1 + $0xd0] sm:$0xff]
    %v49 = vld [vmem:[%s1 + $0xd8] sm:$0xff]
    %v50 = vld [vmem:[%s1 + $0xe0] sm:$0xff]
    %v51 = vld [vmem:[%s1 + $0xe8] sm:$0xff]
    %v52 = vld [vmem:[%s1 + $0xf0] sm:$0xff]
    %v53 = vld [vmem:[%s1 + $0xf8] sm:$0xff]
    %v54 = vld [vmem:[%s1 + $0x100] sm:$0xff]
    %v55 = vld [vmem:[%s1 + $0x108] sm:$0xff]
    %v56 = vld [vmem:[%s1 + $0x110] sm:$0xff]
    %v57 = vld [vmem:[%s1 + $0x118] sm:$0xff]
    %v58 = vld [vmem:[%s1 + $0x120] sm:$0xff]
    %v59 = vld [vmem:[%s1 + $0x128] sm:$0xff]
    %v60 = vld [vmem:[%s1 + $0x130] sm:$0xff]
    %v61 = vld [vmem:[%s1 + $0x138] sm:$0xff]
    %v62 = vld [vmem:[%s2] sm:$0x1]
    %v64 = vlaneseq
    %v65 = vshrl.u32 %v64, 7
    %v66 = vsub.s32 0, %v65
    %v67 = vrot.slane %v62, %v66
    %v70 = vcombine.high %v21, %v21
    %v72 = vunpack.c.l.s4 1983009808
    %v73 = vunpack.c.0.s8 %v72
    %v74 = vlaneseq
    %v75 = vshrl.u32 %v74, 7
    %v76 = vsub.s32 %v73, %v75
    %v77 = vrot.slane %v21, %v76
    %v79 = vunpack.c.l.s4 1983009808
    %v80 = vunpack.c.0.s8 %v79
    %v81 = vlaneseq
    %v82 = vshrl.u32 %v81, 7
    %v83 = vsub.s32 %v80, %v82
    %v84 = vrot.slane %v70, %v83
    %v85 = vcombine.high %v77, %v77
    %vm88 = vcmask 523264
    %v89 = vsel %vm88, %v84, 0
    %91 = vmatprep.subr.mxu0 0.0
    %92 = vmatpush1.msra.mxu0 %v22
    %93 = vmatprep.subr.mxu0 0.0
    %94 = vmatpush1.msra.mxu0 %v23
    %95 = vmatprep.subr.mxu0 0.0
    %96 = vmatpush1.msra.mxu0 %v24
    %97 = vmatprep.subr.mxu0 0.0
    %98 = vmatpush1.msra.mxu0 %v25
    %99 = vmatprep.subr.mxu0 0.0
    %100 = vmatpush1.msra.mxu0 %v26
    %101 = vmatprep.subr.mxu0 0.0
    %102 = vmatpush1.msra.mxu0 %v27
    %103 = vmatprep.subr.mxu0 0.0
    %104 = vmatpush1.msra.mxu0 %v28
    %105 = vmatprep.subr.mxu0 0.0
    %106 = vmatpush1.msra.mxu0 %v29
    %107 = vmatprep.subr.mxu0 0.0
    %108 = vmatpush1.msra.mxu0 %v30
    %109 = vmatprep.subr.mxu0 0.0
    %110 = vmatpush1.msra.mxu0 %v31
    %111 = vmatprep.subr.mxu0 0.0
    %112 = vmatpush1.msra.mxu0 %v32
    %113 = vmatprep.subr.mxu0 0.0
    %114 = vmatpush1.msra.mxu0 %v33
    %115 = vmatprep.subr.mxu0 0.0
    %116 = vmatpush1.msra.mxu0 %v34
    %117 = vmatprep.subr.mxu0 0.0
    %118 = vmatpush1.msra.mxu0 %v35
    %119 = vmatprep.subr.mxu0 0.0
    %120 = vmatpush1.msra.mxu0 %v36
    %121 = vmatprep.subr.mxu0 0.0
    %122 = vmatpush1.msra.mxu0 %v37
    %123 = vmatprep.subr.mxu0 0.0
    %124 = vmatpush1.msra.mxu0 %v38
    %125 = vmatprep.subr.mxu0 0.0
    %126 = vmatpush1.msra.mxu0 %v39
    %127 = vmatprep.subr.mxu0 0.0
    %128 = vmatpush1.msra.mxu0 %v40
    %129 = vmatprep.subr.mxu0 0.0
    %130 = vmatpush1.msra.mxu0 %v41
    %131 = vmatprep.subr.mxu0 0.0
    %132 = vmatpush1.msra.mxu0 %v42
    %133 = vmatprep.subr.mxu0 0.0
    %134 = vmatpush1.msra.mxu0 %v43
    %135 = vmatprep.subr.mxu0 0.0
    %136 = vmatpush1.msra.mxu0 %v44
    %137 = vmatprep.subr.mxu0 0.0
    %138 = vmatpush1.msra.mxu0 %v45
    %139 = vmatprep.subr.mxu0 0.0
    %140 = vmatpush1.msra.mxu0 %v46
    %141 = vmatprep.subr.mxu0 0.0
    %142 = vmatpush1.msra.mxu0 %v47
    %143 = vmatprep.subr.mxu0 0.0
    %144 = vmatpush1.msra.mxu0 %v48
    %145 = vmatprep.subr.mxu0 0.0
    %146 = vmatpush1.msra.mxu0 %v49
    %147 = vmatprep.subr.mxu0 0.0
    %148 = vmatpush1.msra.mxu0 %v50
    %149 = vmatprep.subr.mxu0 0.0
    %150 = vmatpush1.msra.mxu0 %v51
    %151 = vmatprep.subr.mxu0 0.0
    %152 = vmatpush1.msra.mxu0 %v52
    %153 = vmatprep.subr.mxu0 0.0
    %154 = vmatpush1.msra.mxu0 %v53
    %155 = vmatprep.mubr.f32.mxu0 %v85
    %156 = vmatmul.mubr.f32.gmra.mrb[0].mxu0 %v77
    %v157 = vpop.f32.mrb[0].mxu0
    %v158 = vadd.f32 %v67, %v157
    %v159 = vpop.f32.mrb[0].mxu0
    %160 = vdwg.mxu0
    %161 = vmatprep.subr.mxu0 0.0
    %162 = vmatpush1.msra.mxu0 %v54
    %163 = vmatprep.subr.mxu0 0.0
    %164 = vmatpush1.msra.mxu0 %v55
    %165 = vmatprep.subr.mxu0 0.0
    %166 = vmatpush1.msra.mxu0 %v56
    %167 = vmatprep.subr.mxu0 0.0
    %168 = vmatpush1.msra.mxu0 %v57
    %169 = vmatprep.subr.mxu0 0.0
    %170 = vmatpush1.msra.mxu0 %v58
    %171 = vmatprep.subr.mxu0 0.0
    %172 = vmatpush1.msra.mxu0 %v59
    %173 = vmatprep.subr.mxu0 0.0
    %174 = vmatpush1.msra.mxu0 %v60
    %175 = vmatprep.subr.mxu0 0.0
    %176 = vmatpush1.msra.mxu0 %v61
    %177 = vmatprep.subr.mxu0 0.0
    %178 = vmatpush1.msra.mxu0 0.0
    %179 = vmatprep.subr.mxu0 0.0
    %180 = vmatpush1.msra.mxu0 0.0
    %181 = vmatprep.subr.mxu0 0.0
    %182 = vmatpush1.msra.mxu0 0.0
    %183 = vmatprep.subr.mxu0 0.0
    %184 = vmatpush1.msra.mxu0 0.0
    %185 = vmatprep.subr.mxu0 0.0
    %186 = vmatpush1.msra.mxu0 0.0
    %187 = vmatprep.subr.mxu0 0.0
    %188 = vmatpush1.msra.mxu0 0.0
    %189 = vmatprep.subr.mxu0 0.0
    %190 = vmatpush1.msra.mxu0 0.0
    %191 = vmatprep.subr.mxu0 0.0
    %192 = vmatpush1.msra.mxu0 0.0
    %193 = vmatprep.subr.mxu0 0.0
    %194 = vmatpush1.msra.mxu0 0.0
    %195 = vmatprep.subr.mxu0 0.0
    %196 = vmatpush1.msra.mxu0 0.0
    %197 = vmatprep.subr.mxu0 0.0
    %198 = vmatpush1.msra.mxu0 0.0
    %199 = vmatprep.subr.mxu0 0.0
    %200 = vmatpush1.msra.mxu0 0.0
    %201 = vmatprep.subr.mxu0 0.0
    %202 = vmatpush1.msra.mxu0 0.0
    %203 = vmatprep.subr.mxu0 0.0
    %204 = vmatpush1.msra.mxu0 0.0
    %205 = vmatprep.subr.mxu0 0.0
    %206 = vmatpush1.msra.mxu0 0.0
    %207 = vmatprep.subr.mxu0 0.0
    %208 = vmatpush1.msra.mxu0 0.0
    %209 = vmatprep.subr.mxu0 0.0
    %210 = vmatpush1.msra.mxu0 0.0
    %211 = vmatprep.subr.mxu0 0.0
    %212 = vmatpush1.msra.mxu0 0.0
    %213 = vmatprep.subr.mxu0 0.0
    %214 = vmatpush1.msra.mxu0 0.0
    %215 = vmatprep.subr.mxu0 0.0
    %216 = vmatpush1.msra.mxu0 0.0
    %217 = vmatprep.subr.mxu0 0.0
    %218 = vmatpush1.msra.mxu0 0.0
    %219 = vmatprep.subr.mxu0 0.0
    %220 = vmatpush1.msra.mxu0 0.0
    %221 = vmatprep.subr.mxu0 0.0
    %222 = vmatpush1.msra.mxu0 0.0
    %223 = vmatprep.subr.mxu0 0.0
    %224 = vmatpush1.msra.mxu0 0.0
    %225 = vmatprep.mubr.f32.mxu0 0.0
    %226 = vmatmul.mubr.f32.gmra.mrb[0].mxu0 %v89
    %v227 = vpop.f32.mrb[0].mxu0
    %v228 = vadd.f32 %v158, %v227
    %v229 = vpop.f32.mrb[0].mxu0
    %230 = vdwg.mxu0
    %v231 = vmax.f32 %v228, 0.0
    %v232 = vld [vmem:[%s3] sm:$0xff]
    %v233 = vld [vmem:[%s3 + $0x8] sm:$0xff]
    %v234 = vld [vmem:[%s3 + $0x10] sm:$0xff]
    %v235 = vld [vmem:[%s3 + $0x18] sm:$0xff]
    %v236 = vld [vmem:[%s3 + $0x20] sm:$0xff]
    %v237 = vld [vmem:[%s3 + $0x28] sm:$0xff]
    %v238 = vld [vmem:[%s3 + $0x30] sm:$0x3]
    %v239 = vld [vmem:[%s4] sm:$0x1]
    %v241 = vlaneseq
    %v242 = vshrl.u32 %v241, 7
    %v243 = vsub.s32 0, %v242
    %v244 = vrot.slane %v239, %v243
    %vm246 = vcmask 408576
    %v248 = vsel %vm246, %v231, 0
    %vm250 = vcmask 1041408
    %v252 = vsel %vm250, %v238, 0
    %254 = vmatprep.subr.mxu0 0.0
    %255 = vmatpush1.msra.mxu0 %v232
    %256 = vmatprep.subr.mxu0 0.0
    %257 = vmatpush1.msra.mxu0 %v233
    %258 = vmatprep.subr.mxu0 0.0
    %259 = vmatpush1.msra.mxu0 %v234
    %260 = vmatprep.subr.mxu0 0.0
    %261 = vmatpush1.msra.mxu0 %v235
    %262 = vmatprep.subr.mxu0 0.0
    %263 = vmatpush1.msra.mxu0 %v236
    %264 = vmatprep.subr.mxu0 0.0
    %265 = vmatpush1.msra.mxu0 %v237
    %266 = vmatprep.subr.mxu0 0.0
    %267 = vmatpush1.msra.mxu0 %v252
    %268 = vmatprep.subr.mxu0 0.0
    %269 = vmatpush1.msra.mxu0 0.0
    %270 = vmatprep.subr.mxu0 0.0
    %271 = vmatpush1.msra.mxu0 0.0
    %272 = vmatprep.subr.mxu0 0.0
    %273 = vmatpush1.msra.mxu0 0.0
    %274 = vmatprep.subr.mxu0 0.0
    %275 = vmatpush1.msra.mxu0 0.0
    %276 = vmatprep.subr.mxu0 0.0
    %277 = vmatpush1.msra.mxu0 0.0
    %278 = vmatprep.subr.mxu0 0.0
    %279 = vmatpush1.msra.mxu0 0.0
    %280 = vmatprep.subr.mxu0 0.0
    %281 = vmatpush1.msra.mxu0 0.0
    %282 = vmatprep.subr.mxu0 0.0
    %283 = vmatpush1.msra.mxu0 0.0
    %284 = vmatprep.subr.mxu0 0.0
    %285 = vmatpush1.msra.mxu0 0.0
    %286 = vmatprep.subr.mxu0 0.0
    %287 = vmatpush1.msra.mxu0 0.0
    %288 = vmatprep.subr.mxu0 0.0
    %289 = vmatpush1.msra.mxu0 0.0
    %290 = vmatprep.subr.mxu0 0.0
    %291 = vmatpush1.msra.mxu0 0.0
    %292 = vmatprep.subr.mxu0 0.0
    %293 = vmatpush1.msra.mxu0 0.0
    %294 = vmatprep.subr.mxu0 0.0
    %295 = vmatpush1.msra.mxu0 0.0
    %296 = vmatprep.subr.mxu0 0.0
    %297 = vmatpush1.msra.mxu0 0.0
    %298 = vmatprep.subr.mxu0 0.0
    %299 = vmatpush1.msra.mxu0 0.0
    %300 = vmatprep.subr.mxu0 0.0
    %301 = vmatpush1.msra.mxu0 0.0
    %302 = vmatprep.subr.mxu0 0.0
    %303 = vmatpush1.msra.mxu0 0.0
    %304 = vmatprep.subr.mxu0 0.0
    %305 = vmatpush1.msra.mxu0 0.0
    %306 = vmatprep.subr.mxu0 0.0
    %307 = vmatpush1.msra.mxu0 0.0
    %308 = vmatprep.subr.mxu0 0.0
    %309 = vmatpush1.msra.mxu0 0.0
    %310 = vmatprep.subr.mxu0 0.0
    %311 = vmatpush1.msra.mxu0 0.0
    %312 = vmatprep.subr.mxu0 0.0
    %313 = vmatpush1.msra.mxu0 0.0
    %314 = vmatprep.subr.mxu0 0.0
    %315 = vmatpush1.msra.mxu0 0.0
    %316 = vmatprep.subr.mxu0 0.0
    %317 = vmatpush1.msra.mxu0 0.0
    %318 = vmatprep.mubr.f32.mxu0 0.0
    %319 = vmatmul.mubr.f32.gmra.mrb[0].mxu0 %v248
    %v320 = vpop.f32.mrb[0].mxu0
    %v321 = vadd.f32 %v244, %v320
    %v322 = vpop.f32.mrb[0].mxu0
    %323 = vdwg.mxu0
    %v324 = vsel %vm250, %v321, -inf
    %v325 = vrot.slane %v324, 4
    %v326 = vmax.f32 %v324, %v325
    %v327 = vrot.slane %v326, 2
    %v328 = vmax.f32 %v326, %v327
    %v329 = vrot.slane %v328, 1
    %v330 = vmax.f32 %v328, %v329
    %v331 = vsub.f32 %v321, %v330
    %v332 = vmul.f32 %v331, 1.442695
    %v333 = vpow.pop %v332
    %v334 = vsel %vm250, %v333, 0.0
    %v335 = vrot.slane %v334, 4
    %v336 = vadd.f32 %v334, %v335
    %v337 = vrot.slane %v336, 2
    %v338 = vadd.f32 %v336, %v337
    %v339 = vrot.slane %v338, 1
    %v340 = vadd.f32 %v338, %v339
    %v341 = vlog2.pop %v340
    %v342 = vmul.f32 %v341, 0.6931472
    %v343 = vsub.f32 %v331, %v342
    %344 = vst [vmem:[#allocation2] sm:$0x3] %v343
    // Predicated region
    $region22: #{net_forward.5} parent=1 // pred_check
      _
    $region23: #{net_forward.5} parent=1 // pred_check_branch
      %346 = sbr.rel (0) target = $region25
    $region24: #{net_forward.5} parent=1 // pred_region
      %s348 = ssub.s32 32, 32
      %349 = vsyncadd [#allocation3], %s348
      %s351 = sshll.u32 [#allocation2], 4
      %s352 = int_to_ptr.vmem [resolvable:$true] %s351
      %354 = dma.vmem_to_hbm [thread:$0]  %s352, 32, %s5, [#allocation3]
    $region25: #{net_forward.5} parent=1 // pred_fallthru
      _
    // Predicated region
    $region26: #{net_forward.5} parent=1 // pred_check
      _
    $region27: #{net_forward.5} parent=1 // pred_check_branch
      %356 = sbr.rel (0) target = $region29
    $region28: #{net_forward.5} parent=1 // pred_region
      %357 = dma.done [#allocation3], 32
    $region29: #{net_forward.5} parent=1 // pred_fallthru
      _
    %358 = vsyncpa [#allocation3], 1

</llo_original>
